<compile_context>
chip_gen: v6e
topology: v6e:2x2x1
jax: 0.10.0
libtpu: 0.0.40
codegen_flags: <defaults>
</compile_context>

<pallas_src>
import functools

import jax
import jax.numpy as jnp
from jax import lax
from jax.experimental import pallas as pl
from jax.experimental.pallas import tpu as pltpu

K_EPS = 1e-8  # pytorch3d kEpsilon


def _round_up(x, m):
    return ((x + m - 1) // m) * m


def _raster_kernel(pix_ref, face_ref, attr_ref, out_ref, zbest_ref, *, dp):
    # pix_ref : (2, TP)      rows = [x_ndc, y_ndc] for this row-tile of pixels
    # face_ref: (Fc, 16)     cols = [a0,b0,c0, a1,b1,c1, a2,b2,c2,
    #                                z0,z1,z2, z1*z2, z0*z2, z0*z1, face_ok]
    # attr_ref: (3, Dp, Fc)  per-vertex attribute slabs (channels x faces)
    # out_ref : (Dp, TP)     lane-dense output block, resident across the c axis
    # zbest_ref: (1, TP)     running nearest-z per pixel (VMEM scratch)
    c = pl.program_id(2)
    nc = pl.num_programs(2)

    @pl.when(c == 0)
    def _init():
        zbest_ref[...] = jnp.full_like(zbest_ref, jnp.inf)
        out_ref[...] = jnp.zeros_like(out_ref)

    xf = pix_ref[0:1, :]                                   # (1, TP)
    yf = pix_ref[1:2, :]                                   # (1, TP)

    fd = face_ref[...]                                     # (Fc, 16)
    a0, b0, c0 = fd[:, 0:1], fd[:, 1:2], fd[:, 2:3]        # (Fc, 1) each
    a1, b1, c1 = fd[:, 3:4], fd[:, 4:5], fd[:, 5:6]
    a2, b2, c2 = fd[:, 6:7], fd[:, 7:8], fd[:, 8:9]
    z0, z1, z2 = fd[:, 9:10], fd[:, 10:11], fd[:, 11:12]
    z1z2, z0z2, z0z1 = fd[:, 12:13], fd[:, 13:14], fd[:, 14:15]
    face_ok = fd[:, 15:16] > 0.5

    # Barycentric coords (already divided by area + eps); faces x pixels.
    l0 = a0 * xf + b0 * yf + c0                            # (Fc, TP)
    l1 = a1 * xf + b1 * yf + c1
    l2 = a2 * xf + b2 * yf + c2
    valid = (l0 > 0.0) & (l1 > 0.0) & (l2 > 0.0) & face_ok

    # Perspective-corrected barycentrics; denom clamped at kEps (NaN guard),
    # approx reciprocal runs on the otherwise-idle EUP slot.
    top0 = l0 * z1z2
    top1 = l1 * z0z2
    top2 = l2 * z0z1
    inv = pl.reciprocal(jnp.maximum(top0 + top1 + top2, K_EPS), approx=True)
    cb0 = jnp.where(valid, top0 * inv, 0.0)
    cb1 = jnp.where(valid, top1 * inv, 0.0)
    cb2 = jnp.where(valid, top2 * inv, 0.0)

    # Nearest-z face within this chunk (ties -> smallest local face index).
    pz = cb0 * z0 + cb1 * z1 + cb2 * z2
    zkey = jnp.where(valid, pz, jnp.inf)                   # keep z path in f32
    chunk_minz = jnp.min(zkey, axis=0, keepdims=True)      # (1, TP)
    fio = lax.broadcasted_iota(jnp.int32, zkey.shape, 0)
    cand = valid & (zkey == chunk_minz)
    fc = zkey.shape[0]
    best = jnp.min(jnp.where(cand, fio, fc), axis=0, keepdims=True)
    sel = fio == best                                      # one-hot (Fc, TP)

    # Interpolation: out^T = sum_v attr_v (Dp,Fc) @ (sel*cb_v) (Fc,TP) -> (Dp,TP)
    dt = attr_ref.dtype
    chunk_out = jnp.dot(attr_ref[0], jnp.where(sel, cb0, 0.0).astype(dt),
                        preferred_element_type=jnp.float32)
    chunk_out += jnp.dot(attr_ref[1], jnp.where(sel, cb1, 0.0).astype(dt),
                         preferred_element_type=jnp.float32)
    chunk_out += jnp.dot(attr_ref[2], jnp.where(sel, cb2, 0.0).astype(dt),
                         preferred_element_type=jnp.float32)

    # Online z-buffer across face chunks: strictly-nearer wins, so earlier
    # chunks keep ties (= smallest global face index).
    better = chunk_minz < zbest_ref[...]
    zbest_ref[...] = jnp.where(better, chunk_minz, zbest_ref[...])
    out_ref[...] = jnp.where(better, chunk_out, out_ref[...]).astype(out_ref.dtype)

    @pl.when(c == nc - 1)
    def _finalize():
        # Exact 0/1 visibility mask into the last channel row.
        out_ref[dp - 1:dp, :] = (zbest_ref[...] < jnp.inf).astype(out_ref.dtype)


def rasterize_forward(vertices, faces, attributes, image_size,
                      tile_rows=8, face_chunk=256, mxu_dtype=jnp.float32):
    """vertices (N,V,3), faces (N,F,3) int, attributes (N,F,3,D)
       -> (N, D+1, H, W) float32 (interpolated attrs + vismask channel)."""
    N = vertices.shape[0]
    F = faces.shape[1]
    D = attributes.shape[-1]
    H = W = int(image_size)
    assert H % tile_rows == 0, "image height must be divisible by tile_rows"
    TP = tile_rows * W
    assert TP % 128 == 0, "tile_rows * image_size must be a multiple of 128"
    Dp = D + 1

    Fc = min(_round_up(face_chunk, 128), _round_up(F, 128))
    F_pad = _round_up(F, Fc)
    C = F_pad // Fc

    verts = vertices.astype(jnp.float32)
    fixed = verts.at[..., :2].multiply(-1.0)       # fixed_vertices[..., :2] *= -1

    fv = jax.vmap(lambda v, f: v[f])(fixed, faces)            # (N, F, 3, 3)
    x0, y0, z0 = fv[..., 0, 0], fv[..., 0, 1], fv[..., 0, 2]
    x1, y1, z1 = fv[..., 1, 0], fv[..., 1, 1], fv[..., 1, 2]
    x2, y2, z2 = fv[..., 2, 0], fv[..., 2, 1], fv[..., 2, 2]

    # edge_function(v2, v0, v1) = 2 * signed face area
    area = (x2 - x0) * (y1 - y0) - (y2 - y0) * (x1 - x0)
    denom = area + K_EPS
    a0 = (y2 - y1) / denom; b0 = -(x2 - x1) / denom; c0 = (y1 * x2 - x1 * y2) / denom
    a1 = (y0 - y2) / denom; b1 = -(x0 - x2) / denom; c1 = (y2 * x0 - x2 * y0) / denom
    a2 = (y1 - y0) / denom; b2 = -(x1 - x0) / denom; c2 = (y0 * x1 - x0 * y1) / denom
    zmin = jnp.minimum(jnp.minimum(z0, z1), z2)
    face_ok = ((area > 0.0) & (zmin >= K_EPS)).astype(jnp.float32)

    face_data = jnp.stack(
        [a0, b0, c0, a1, b1, c1, a2, b2, c2,
         z0, z1, z2, z1 * z2, z0 * z2, z0 * z1, face_ok], axis=-1,
    ).astype(jnp.float32)                                     # (N, F, 16)
    face_data = jnp.pad(face_data, ((0, 0), (0, F_pad - F), (0, 0)))  # padded faces culled

    # Attributes: channel-major, faces on lanes; extra ones-channel is the
    # vismask slot (overwritten exactly in the kernel's finalize step).
    attr = attributes.astype(jnp.float32)
    attr_aug = jnp.concatenate([attr, jnp.ones((N, F, 3, 1), jnp.float32)], axis=-1)
    attr_t = attr_aug.transpose(0, 2, 3, 1)                   # (N, 3, Dp, F)
    attr_t = jnp.pad(attr_t, ((0, 0), (0, 0), (0, 0), (0, F_pad - F)))
    attr_t = attr_t.astype(mxu_dtype)   # optionally bf16 on v6e/v7x for MXU

    # Per-pixel NDC centers, row-major (y, x); +X left, +Y up (pytorch3d).
    xs = 1.0 - (2.0 * jnp.arange(W, dtype=jnp.float32) + 1.0) / W
    ys = 1.0 - (2.0 * jnp.arange(H, dtype=jnp.float32) + 1.0) / H
    pix = jnp.stack([jnp.tile(xs, H), jnp.repeat(ys, W)], axis=0)  # (2, H*W)

    kernel = functools.partial(_raster_kernel, dp=Dp)
    grid = (N, H // tile_rows, C)   # face-chunk axis last (reduction / "arbitrary")

    out = pl.pallas_call(
        kernel,
        out_shape=jax.ShapeDtypeStruct((N, Dp, H * W), jnp.float32),
        grid_spec=pltpu.PrefetchScalarGridSpec(
            num_scalar_prefetch=0,
            grid=grid,
            in_specs=[
                pl.BlockSpec((2, TP), lambda n, t, c: (0, t)),
                pl.BlockSpec((None, Fc, 16), lambda n, t, c: (n, c, 0)),
                pl.BlockSpec((None, 3, Dp, Fc), lambda n, t, c: (n, 0, 0, c)),
            ],
            out_specs=pl.BlockSpec((None, Dp, TP), lambda n, t, c: (n, 0, t)),
            scratch_shapes=[pltpu.VMEM((1, TP), jnp.float32)],
        ),
        compiler_params=pltpu.CompilerParams(
            dimension_semantics=("parallel", "parallel", "arbitrary"),
            vmem_limit_bytes=40 * 1024 * 1024,   # fits v7x's smaller VMEM too
        ),
    )(pix, face_data, attr_t)

    # (N, Dp, H*W) is already channel-major -> plain reshape, no transpose pass.
    return out.reshape(N, Dp, H, W)


class Pytorch3dRasterizer:
    """JAX/Pallas analogue of the PyTorch module (fixed raster settings)."""

    def __init__(self, image_size=224):
        self.image_size = image_size

    def __call__(self, vertices, faces, attributes):
        return rasterize_forward(vertices, faces, attributes, self.image_size)


if __name__ == "__main__":
    key = jax.random.PRNGKey(0)
    k1, k2, k3, k4 = jax.random.split(key, 4)

    N, V, F, D = 2, 12, 8, 4
    image_size = 16

    xy = jax.random.uniform(k1, (N, V, 2), minval=-0.9, maxval=0.9)
    z = jax.random.uniform(k2, (N, V, 1), minval=0.2, maxval=1.0)
    vertices = jnp.concatenate([xy, z], axis=-1).astype(jnp.float32)
    faces = jax.random.randint(k3, (N, F, 3), 0, V, dtype=jnp.int32)
    attributes = jax.random.normal(k4, (N, F, 3, D), dtype=jnp.float32)

    rasterizer = Pytorch3dRasterizer(image_size=image_size)
    out = rasterizer(vertices, faces, attributes)
    out = jax.block_until_ready(out)

    assert out.shape == (N, D + 1, image_size, image_size), out.shape
    assert bool(jnp.all(jnp.isfinite(out)))
    print("KERNEL_OK")
</pallas_src>

<mosaic_0001>
module attributes {stable_mosaic.version = 11 : i64} {
  func.func @_raster_kernel(%arg0: i32, %arg1: i32, %arg2: i32, %arg3: memref<2x128xf32, #tpu.memory_space<vmem>>, %arg4: memref<1x128x16xf32, #tpu.memory_space<vmem>>, %arg5: memref<1x3x5x128xf32, #tpu.memory_space<vmem>>, %arg6: memref<1x5x128xf32, #tpu.memory_space<vmem>>, %arg7: memref<1x128xf32, #tpu.memory_space<vmem>>) attributes {dimension_semantics = [#tpu.dimension_semantics<parallel>, #tpu.dimension_semantics<parallel>, #tpu.dimension_semantics<arbitrary>], iteration_bounds = array<i64: 2, 2, 1>, scalar_prefetch = 0 : i64, scratch_operands = 1 : i64, tpu.core_type = #tpu.core_type<tc>, window_params = [{transform_indices = @transform_0, window_bounds = array<i64: 2, 128>}, {transform_indices = @transform_1, window_bounds = array<i64: 1, 128, 16>}, {transform_indices = @transform_2, window_bounds = array<i64: 1, 3, 5, 128>}, {transform_indices = @transform_3, window_bounds = array<i64: 1, 5, 128>}]} {
    %c0_i32 = arith.constant 0 : i32
    %0 = arith.cmpi eq, %arg2, %c0_i32 : i32
    %1 = arith.extui %0 : i1 to i32
    %c0_i32_0 = arith.constant 0 : i32
    %2 = arith.cmpi ne, %1, %c0_i32_0 : i32
    scf.if %2 {
      %cst_47 = arith.constant 0x7F800000 : f32
      %137 = vector.broadcast %cst_47 : f32 to vector<1x128xf32>
      %c0_48 = arith.constant 0 : index
      %c0_49 = arith.constant 0 : index
      %138 = vector.load %arg7[%c0_48, %c0_49] : memref<1x128xf32, #tpu.memory_space<vmem>>, vector<1x128xf32>
      tpu.vector_store %arg7[%c0_48, %c0_49], %137 {strides = array<i32>} : memref<1x128xf32, #tpu.memory_space<vmem>>, vector<1x128xf32>,
      %cst_50 = arith.constant 0.000000e+00 : f32
      %139 = vector.broadcast %cst_50 : f32 to vector<5x128xf32>
      %c0_51 = arith.constant 0 : index
      %c0_52 = arith.constant 0 : index
      %c0_53 = arith.constant 0 : index
      %140 = vector.load %arg6[%c0_51, %c0_52, %c0_53] : memref<1x5x128xf32, #tpu.memory_space<vmem>>, vector<1x5x128xf32>
      %141 = vector.shape_cast %140 : vector<1x5x128xf32> to vector<5x128xf32>
      %142 = vector.shape_cast %139 : vector<5x128xf32> to vector<1x5x128xf32>
      tpu.vector_store %arg6[%c0_51, %c0_52, %c0_53], %142 {strides = array<i32>} : memref<1x5x128xf32, #tpu.memory_space<vmem>>, vector<1x5x128xf32>,
    } else {
    }
    %c0 = arith.constant 0 : index
    %c0_1 = arith.constant 0 : index
    %3 = vector.load %arg3[%c0, %c0_1] : memref<2x128xf32, #tpu.memory_space<vmem>>, vector<1x128xf32>
    %c1 = arith.constant 1 : index
    %c0_2 = arith.constant 0 : index
    %4 = vector.load %arg3[%c1, %c0_2] : memref<2x128xf32, #tpu.memory_space<vmem>>, vector<1x128xf32>
    %c0_3 = arith.constant 0 : index
    %c0_4 = arith.constant 0 : index
    %c0_5 = arith.constant 0 : index
    %5 = vector.load %arg4[%c0_3, %c0_4, %c0_5] : memref<1x128x16xf32, #tpu.memory_space<vmem>>, vector<1x128x16xf32>
    %6 = vector.shape_cast %5 : vector<1x128x16xf32> to vector<128x16xf32>
    %7 = vector.extract_strided_slice %6 {offsets = [0, 0], sizes = [128, 1], strides = [1, 1]} : vector<128x16xf32> to vector<128x1xf32>
    %8 = vector.extract_strided_slice %6 {offsets = [0, 1], sizes = [128, 1], strides = [1, 1]} : vector<128x16xf32> to vector<128x1xf32>
    %9 = vector.extract_strided_slice %6 {offsets = [0, 2], sizes = [128, 1], strides = [1, 1]} : vector<128x16xf32> to vector<128x1xf32>
    %10 = vector.extract_strided_slice %6 {offsets = [0, 3], sizes = [128, 1], strides = [1, 1]} : vector<128x16xf32> to vector<128x1xf32>
    %11 = vector.extract_strided_slice %6 {offsets = [0, 4], sizes = [128, 1], strides = [1, 1]} : vector<128x16xf32> to vector<128x1xf32>
    %12 = vector.extract_strided_slice %6 {offsets = [0, 5], sizes = [128, 1], strides = [1, 1]} : vector<128x16xf32> to vector<128x1xf32>
    %13 = vector.extract_strided_slice %6 {offsets = [0, 6], sizes = [128, 1], strides = [1, 1]} : vector<128x16xf32> to vector<128x1xf32>
    %14 = vector.extract_strided_slice %6 {offsets = [0, 7], sizes = [128, 1], strides = [1, 1]} : vector<128x16xf32> to vector<128x1xf32>
    %15 = vector.extract_strided_slice %6 {offsets = [0, 8], sizes = [128, 1], strides = [1, 1]} : vector<128x16xf32> to vector<128x1xf32>
    %16 = vector.extract_strided_slice %6 {offsets = [0, 9], sizes = [128, 1], strides = [1, 1]} : vector<128x16xf32> to vector<128x1xf32>
    %17 = vector.extract_strided_slice %6 {offsets = [0, 10], sizes = [128, 1], strides = [1, 1]} : vector<128x16xf32> to vector<128x1xf32>
    %18 = vector.extract_strided_slice %6 {offsets = [0, 11], sizes = [128, 1], strides = [1, 1]} : vector<128x16xf32> to vector<128x1xf32>
    %19 = vector.extract_strided_slice %6 {offsets = [0, 12], sizes = [128, 1], strides = [1, 1]} : vector<128x16xf32> to vector<128x1xf32>
    %20 = vector.extract_strided_slice %6 {offsets = [0, 13], sizes = [128, 1], strides = [1, 1]} : vector<128x16xf32> to vector<128x1xf32>
    %21 = vector.extract_strided_slice %6 {offsets = [0, 14], sizes = [128, 1], strides = [1, 1]} : vector<128x16xf32> to vector<128x1xf32>
    %22 = vector.extract_strided_slice %6 {offsets = [0, 15], sizes = [128, 1], strides = [1, 1]} : vector<128x16xf32> to vector<128x1xf32>
    %cst = arith.constant 5.000000e-01 : f32
    %23 = vector.broadcast %cst : f32 to vector<128x1xf32>
    %24 = arith.cmpf ogt, %22, %23 : vector<128x1xf32>
    %25 = vector.broadcast %7 : vector<128x1xf32> to vector<128x128xf32>
    %26 = vector.broadcast %3 : vector<1x128xf32> to vector<128x128xf32>
    %27 = arith.mulf %25, %26 : vector<128x128xf32>
    %28 = vector.broadcast %8 : vector<128x1xf32> to vector<128x128xf32>
    %29 = vector.broadcast %4 : vector<1x128xf32> to vector<128x128xf32>
    %30 = arith.mulf %28, %29 : vector<128x128xf32>
    %31 = arith.addf %27, %30 : vector<128x128xf32>
    %32 = vector.broadcast %9 : vector<128x1xf32> to vector<128x128xf32>
    %33 = arith.addf %31, %32 : vector<128x128xf32>
    %34 = vector.broadcast %10 : vector<128x1xf32> to vector<128x128xf32>
    %35 = vector.broadcast %3 : vector<1x128xf32> to vector<128x128xf32>
    %36 = arith.mulf %34, %35 : vector<128x128xf32>
    %37 = vector.broadcast %11 : vector<128x1xf32> to vector<128x128xf32>
    %38 = vector.broadcast %4 : vector<1x128xf32> to vector<128x128xf32>
    %39 = arith.mulf %37, %38 : vector<128x128xf32>
    %40 = arith.addf %36, %39 : vector<128x128xf32>
    %41 = vector.broadcast %12 : vector<128x1xf32> to vector<128x128xf32>
    %42 = arith.addf %40, %41 : vector<128x128xf32>
    %43 = vector.broadcast %13 : vector<128x1xf32> to vector<128x128xf32>
    %44 = vector.broadcast %3 : vector<1x128xf32> to vector<128x128xf32>
    %45 = arith.mulf %43, %44 : vector<128x128xf32>
    %46 = vector.broadcast %14 : vector<128x1xf32> to vector<128x128xf32>
    %47 = vector.broadcast %4 : vector<1x128xf32> to vector<128x128xf32>
    %48 = arith.mulf %46, %47 : vector<128x128xf32>
    %49 = arith.addf %45, %48 : vector<128x128xf32>
    %50 = vector.broadcast %15 : vector<128x1xf32> to vector<128x128xf32>
    %51 = arith.addf %49, %50 : vector<128x128xf32>
    %cst_6 = arith.constant 0.000000e+00 : f32
    %52 = vector.broadcast %cst_6 : f32 to vector<128x128xf32>
    %53 = arith.cmpf ogt, %33, %52 : vector<128x128xf32>
    %cst_7 = arith.constant 0.000000e+00 : f32
    %54 = vector.broadcast %cst_7 : f32 to vector<128x128xf32>
    %55 = arith.cmpf ogt, %42, %54 : vector<128x128xf32>
    %56 = arith.andi %53, %55 : vector<128x128xi1>
    %cst_8 = arith.constant 0.000000e+00 : f32
    %57 = vector.broadcast %cst_8 : f32 to vector<128x128xf32>
    %58 = arith.cmpf ogt, %51, %57 : vector<128x128xf32>
    %59 = arith.andi %56, %58 : vector<128x128xi1>
    %60 = vector.broadcast %24 : vector<128x1xi1> to vector<128x128xi1>
    %61 = arith.andi %59, %60 : vector<128x128xi1>
    %62 = vector.broadcast %19 : vector<128x1xf32> to vector<128x128xf32>
    %63 = arith.mulf %33, %62 : vector<128x128xf32>
    %64 = vector.broadcast %20 : vector<128x1xf32> to vector<128x128xf32>
    %65 = arith.mulf %42, %64 : vector<128x128xf32>
    %66 = vector.broadcast %21 : vector<128x1xf32> to vector<128x128xf32>
    %67 = arith.mulf %51, %66 : vector<128x128xf32>
    %68 = arith.addf %63, %65 : vector<128x128xf32>
    %69 = arith.addf %68, %67 : vector<128x128xf32>
    %cst_9 = arith.constant 9.99999993E-9 : f32
    %70 = vector.broadcast %cst_9 : f32 to vector<128x128xf32>
    %71 = arith.maximumf %69, %70 : vector<128x128xf32>
    %72 = tpu.reciprocal %71 {approx = true} : vector<128x128xf32> -> vector<128x128xf32>
    %73 = arith.mulf %63, %72 : vector<128x128xf32>
    %cst_10 = arith.constant 0.000000e+00 : f32
    %74 = vector.broadcast %cst_10 : f32 to vector<128x128xf32>
    %75 = arith.select %61, %73, %74 : vector<128x128xi1>, vector<128x128xf32>
    %76 = arith.mulf %65, %72 : vector<128x128xf32>
    %cst_11 = arith.constant 0.000000e+00 : f32
    %77 = vector.broadcast %cst_11 : f32 to vector<128x128xf32>
    %78 = arith.select %61, %76, %77 : vector<128x128xi1>, vector<128x128xf32>
    %79 = arith.mulf %67, %72 : vector<128x128xf32>
    %cst_12 = arith.constant 0.000000e+00 : f32
    %80 = vector.broadcast %cst_12 : f32 to vector<128x128xf32>
    %81 = arith.select %61, %79, %80 : vector<128x128xi1>, vector<128x128xf32>
    %82 = vector.broadcast %16 : vector<128x1xf32> to vector<128x128xf32>
    %83 = arith.mulf %75, %82 : vector<128x128xf32>
    %84 = vector.broadcast %17 : vector<128x1xf32> to vector<128x128xf32>
    %85 = arith.mulf %78, %84 : vector<128x128xf32>
    %86 = arith.addf %83, %85 : vector<128x128xf32>
    %87 = vector.broadcast %18 : vector<128x1xf32> to vector<128x128xf32>
    %88 = arith.mulf %81, %87 : vector<128x128xf32>
    %89 = arith.addf %86, %88 : vector<128x128xf32>
    %cst_13 = arith.constant 0x7F800000 : f32
    %90 = vector.broadcast %cst_13 : f32 to vector<128x128xf32>
    %91 = arith.select %61, %89, %90 : vector<128x128xi1>, vector<128x128xf32>
    %cst_14 = arith.constant dense<0x7F800000> : vector<128xf32>
    %92 = vector.multi_reduction <minimumf>, %91, %cst_14 [0] : vector<128x128xf32> to vector<128xf32>
    %93 = vector.shape_cast %92 : vector<128xf32> to vector<1x128xf32>
    %94 = tpu.iota {dimensions = array<i32: 0>} : vector<128x128xi32>
    %95 = vector.broadcast %93 : vector<1x128xf32> to vector<128x128xf32>
    %96 = arith.cmpf oeq, %91, %95 : vector<128x128xf32>
    %97 = arith.andi %61, %96 : vector<128x128xi1>
    %c128_i32 = arith.constant 128 : i32
    %98 = vector.broadcast %c128_i32 : i32 to vector<128x128xi32>
    %99 = arith.select %97, %94, %98 : vector<128x128xi1>, vector<128x128xi32>
    %cst_15 = arith.constant dense<2147483647> : vector<128xi32>
    %100 = vector.multi_reduction <minsi>, %99, %cst_15 [0] : vector<128x128xi32> to vector<128xi32>
    %101 = vector.shape_cast %100 : vector<128xi32> to vector<1x128xi32>
    %102 = vector.broadcast %101 : vector<1x128xi32> to vector<128x128xi32>
    %103 = arith.cmpi eq, %94, %102 : vector<128x128xi32>
    %c0_16 = arith.constant 0 : index
    %c0_17 = arith.constant 0 : index
    %c0_18 = arith.constant 0 : index
    %c0_19 = arith.constant 0 : index
    %104 = vector.load %arg5[%c0_16, %c0_17, %c0_18, %c0_19] : memref<1x3x5x128xf32, #tpu.memory_space<vmem>>, vector<1x1x5x128xf32>
    %105 = vector.shape_cast %104 : vector<1x1x5x128xf32> to vector<5x128xf32>
    %cst_20 = arith.constant 0.000000e+00 : f32
    %106 = vector.broadcast %cst_20 : f32 to vector<128x128xf32>
    %107 = arith.select %103, %75, %106 : vector<128x128xi1>, vector<128x128xf32>
    %cst_21 = arith.constant dense<0.000000e+00> : vector<5x128xf32>
    %108 = tpu.matmul %105, %107, %cst_21 {dimension_numbers = #tpu.dot_dimension_numbers<[1], [0], [0], [1], [0, 0, 1, 1], [], []>} : vector<5x128xf32>, vector<128x128xf32>, vector<5x128xf32> -> vector<5x128xf32>
    %c0_22 = arith.constant 0 : index
    %c1_23 = arith.constant 1 : index
    %c0_24 = arith.constant 0 : index
    %c0_25 = arith.constant 0 : index
    %109 = vector.load %arg5[%c0_22, %c1_23, %c0_24, %c0_25] : memref<1x3x5x128xf32, #tpu.memory_space<vmem>>, vector<1x1x5x128xf32>
    %110 = vector.shape_cast %109 : vector<1x1x5x128xf32> to vector<5x128xf32>
    %cst_26 = arith.constant 0.000000e+00 : f32
    %111 = vector.broadcast %cst_26 : f32 to vector<128x128xf32>
    %112 = arith.select %103, %78, %111 : vector<128x128xi1>, vector<128x128xf32>
    %cst_27 = arith.constant dense<0.000000e+00> : vector<5x128xf32>
    %113 = tpu.matmul %110, %112, %cst_27 {dimension_numbers = #tpu.dot_dimension_numbers<[1], [0], [0], [1], [0, 0, 1, 1], [], []>} : vector<5x128xf32>, vector<128x128xf32>, vector<5x128xf32> -> vector<5x128xf32>
    %114 = arith.addf %108, %113 : vector<5x128xf32>
    %c0_28 = arith.constant 0 : index
    %c2 = arith.constant 2 : index
    %c0_29 = arith.constant 0 : index
    %c0_30 = arith.constant 0 : index
    %115 = vector.load %arg5[%c0_28, %c2, %c0_29, %c0_30] : memref<1x3x5x128xf32, #tpu.memory_space<vmem>>, vector<1x1x5x128xf32>
    %116 = vector.shape_cast %115 : vector<1x1x5x128xf32> to vector<5x128xf32>
    %cst_31 = arith.constant 0.000000e+00 : f32
    %117 = vector.broadcast %cst_31 : f32 to vector<128x128xf32>
    %118 = arith.select %103, %81, %117 : vector<128x128xi1>, vector<128x128xf32>
    %cst_32 = arith.constant dense<0.000000e+00> : vector<5x128xf32>
    %119 = tpu.matmul %116, %118, %cst_32 {dimension_numbers = #tpu.dot_dimension_numbers<[1], [0], [0], [1], [0, 0, 1, 1], [], []>} : vector<5x128xf32>, vector<128x128xf32>, vector<5x128xf32> -> vector<5x128xf32>
    %120 = arith.addf %114, %119 : vector<5x128xf32>
    %c0_33 = arith.constant 0 : index
    %c0_34 = arith.constant 0 : index
    %121 = vector.load %arg7[%c0_33, %c0_34] : memref<1x128xf32, #tpu.memory_space<vmem>>, vector<1x128xf32>
    %122 = arith.cmpf olt, %93, %121 : vector<1x128xf32>
    %c0_35 = arith.constant 0 : index
    %c0_36 = arith.constant 0 : index
    %123 = vector.load %arg7[%c0_35, %c0_36] : memref<1x128xf32, #tpu.memory_space<vmem>>, vector<1x128xf32>
    %124 = arith.select %122, %93, %123 : vector<1x128xi1>, vector<1x128xf32>
    %c0_37 = arith.constant 0 : index
    %c0_38 = arith.constant 0 : index
    %125 = vector.load %arg7[%c0_37, %c0_38] : memref<1x128xf32, #tpu.memory_space<vmem>>, vector<1x128xf32>
    tpu.vector_store %arg7[%c0_37, %c0_38], %124 {strides = array<i32>} : memref<1x128xf32, #tpu.memory_space<vmem>>, vector<1x128xf32>,
    %c0_39 = arith.constant 0 : index
    %c0_40 = arith.constant 0 : index
    %c0_41 = arith.constant 0 : index
    %126 = vector.load %arg6[%c0_39, %c0_40, %c0_41] : memref<1x5x128xf32, #tpu.memory_space<vmem>>, vector<1x5x128xf32>
    %127 = vector.shape_cast %126 : vector<1x5x128xf32> to vector<5x128xf32>
    %128 = vector.shape_cast %122 : vector<1x128xi1> to vector<1x128xi1>
    %129 = vector.broadcast %128 : vector<1x128xi1> to vector<5x128xi1>
    %130 = arith.select %129, %120, %127 : vector<5x128xi1>, vector<5x128xf32>
    %c0_42 = arith.constant 0 : index
    %c0_43 = arith.constant 0 : index
    %c0_44 = arith.constant 0 : index
    %131 = vector.load %arg6[%c0_42, %c0_43, %c0_44] : memref<1x5x128xf32, #tpu.memory_space<vmem>>, vector<1x5x128xf32>
    %132 = vector.shape_cast %131 : vector<1x5x128xf32> to vector<5x128xf32>
    %133 = vector.shape_cast %130 : vector<5x128xf32> to vector<1x5x128xf32>
    tpu.vector_store %arg6[%c0_42, %c0_43, %c0_44], %133 {strides = array<i32>} : memref<1x5x128xf32, #tpu.memory_space<vmem>>, vector<1x5x128xf32>,
    %c0_i32_45 = arith.constant 0 : i32
    %134 = arith.cmpi eq, %arg2, %c0_i32_45 : i32
    %135 = arith.extui %134 : i1 to i32
    %c0_i32_46 = arith.constant 0 : i32
    %136 = arith.cmpi ne, %135, %c0_i32_46 : i32
    scf.if %136 {
      %c0_47 = arith.constant 0 : index
      %c0_48 = arith.constant 0 : index
      %137 = vector.load %arg7[%c0_47, %c0_48] : memref<1x128xf32, #tpu.memory_space<vmem>>, vector<1x128xf32>
      %cst_49 = arith.constant 0x7F800000 : f32
      %138 = vector.broadcast %cst_49 : f32 to vector<1x128xf32>
      %139 = arith.cmpf olt, %137, %138 : vector<1x128xf32>
      %140 = arith.extui %139 : vector<1x128xi1> to vector<1x128xi32>
      %141 = arith.sitofp %140 : vector<1x128xi32> to vector<1x128xf32>
      %c0_50 = arith.constant 0 : index
      %c4 = arith.constant 4 : index
      %c0_51 = arith.constant 0 : index
      %142 = vector.load %arg6[%c0_50, %c4, %c0_51] : memref<1x5x128xf32, #tpu.memory_space<vmem>>, vector<1x1x128xf32>
      %143 = vector.shape_cast %142 : vector<1x1x128xf32> to vector<1x128xf32>
      %144 = vector.shape_cast %141 : vector<1x128xf32> to vector<1x1x128xf32>
      tpu.vector_store %arg6[%c0_50, %c4, %c0_51], %144 {strides = array<i32>} : memref<1x5x128xf32, #tpu.memory_space<vmem>>, vector<1x1x128xf32>,
    } else {
    }
    return
  }
  func.func @transform_0(%arg0: i32, %arg1: i32, %arg2: i32) -> (i32, i32) {
    %c0_i32 = arith.constant 0 : i32
    %c0_i32_0 = arith.constant 0 : i32
    return %c0_i32, %arg1 : i32, i32
  }
  func.func @transform_1(%arg0: i32, %arg1: i32, %arg2: i32) -> (i32, i32, i32) {
    %c0_i32 = arith.constant 0 : i32
    %c0_i32_0 = arith.constant 0 : i32
    return %arg0, %arg2, %c0_i32 : i32, i32, i32
  }
  func.func @transform_2(%arg0: i32, %arg1: i32, %arg2: i32) -> (i32, i32, i32, i32) {
    %c0_i32 = arith.constant 0 : i32
    %c0_i32_0 = arith.constant 0 : i32
    %c0_i32_1 = arith.constant 0 : i32
    return %arg0, %c0_i32, %c0_i32_0, %arg2 : i32, i32, i32, i32
  }
  func.func @transform_3(%arg0: i32, %arg1: i32, %arg2: i32) -> (i32, i32, i32) {
    %c0_i32 = arith.constant 0 : i32
    %c0_i32_0 = arith.constant 0 : i32
    return %arg0, %c0_i32, %arg1 : i32, i32, i32
  }
}

</mosaic_0001>

<llo_original>
// kernel: tpu_custom_call.1
$region0: #{tpu_custom_call.1}
  #allocation0 [shape = 'u32[]', space=smem, size = 0x4, offset = 0x4, fixed_abs, tag = 'smem constant byte address 0x4 - core index']
  #allocation1 [shape = 'u32[144,128]{1,0:T(1,128)}', space=vmem, size = 0x12000, scoped, tag = 'internal scratch']
  #allocation2 [shape = 'f32[1,128]{1,0:T(1,128)}', space=vmem, size = 0x200, scoped, tag = 'scratch operand']
  %s0 = inlined_call_operand.vmem [shape: f32[2,256], index: 0, kind: input, shape index: {}]
  %s1 = inlined_call_operand.vmem [shape: f32[2,128,16], index: 1, kind: input, shape index: {}]
  %s2 = inlined_call_operand.vmem [shape: f32[2,3,5,128], index: 2, kind: input, shape index: {}]
  %s3 = inlined_call_operand.vmem [shape: f32[2,5,256], index: 3, kind: output, shape index: {}]
  %s4 = sld [smem:[#allocation0]]
  $region53: #{tpu_custom_call.1} parent=0
    _
  %s6 = ssub.s32 1, %s4
  %s7 = scalar_select 0, %s6, %s4
  loop: start=0, step=1, limit=6
  $region2: #{tpu_custom_call.1} parent=0 // loop_pre_header
    _
  $region3: #{tpu_custom_call.1} parent=0 // loop_header
    %s9 = sphi 0, %s13
    %p10 = scmp.ge.s32.totalorder %s9, 6
    %s16 = sphi 0, %s35
    %s17 = sphi 0, %s31
    %s18 = sphi 0, %s27
    %s19 = sphi 0, %s16
    %s20 = sphi 0, %s17
    %s21 = sphi 0, %s18
    %s22 = sphi 0, %s19
    %s23 = sphi 0, %s20
    %s24 = sphi 0, %s21
    %s38 = sphi 0, %s40
    %s41 = sphi 0, %s38
    %s42 = sphi 0, %s41
    %s58 = sphi 0, %s42
    %s66 = sphi 0, %s68
    %s69 = sphi 0, %s66
    %s70 = sphi 0, %s69
    %s86 = sphi 0, %s70
    %s94 = sphi 0, %s96
    %s97 = sphi 0, %s94
    %s98 = sphi 0, %s97
    %s114 = sphi 0, %s98
    %s122 = sphi 0, %s124
    %s125 = sphi 0, %s122
    %s126 = sphi 0, %s125
    %s142 = sphi 0, %s126
  $region4: #{tpu_custom_call.1} parent=0 // loop_header_branch
    %12 = sbr.rel (%p10) target = $region8
  $region5: #{tpu_custom_call.1} parent=0 // loop_body
    %s14 = ssub.s32 %s9, 1
    %s15 = ssub.s32 %s9, 2
    %s25 = sadd.s32 1, %s18
    %p26 = scmp.ge.s32.totalorder %s25, 1
    %s27 = scalar_select %p26, 0, %s25
    %s28 = sadd.s32 1, %s17
    %s29 = scalar_select %p26, %s28, %s17
    %p30 = scmp.ge.s32.totalorder %s29, 2
    %s31 = scalar_select %p30, 0, %s29
    %s32 = sadd.s32 1, %s16
    %s33 = scalar_select %p30, %s32, %s16
    %p34 = scmp.ge.s32.totalorder %s33, 2
    %s35 = scalar_select %p34, 0, %s33
    %s36 = ssub.s32 %s17, %s31
    %p37 = scmp.eq.s32.totalorder %s36, 0
    %s39 = sadd.s32 %s38, 1
    %s40 = scalar_select %p37, %s38, %s39
    %p43 = pneg %p37
    %p44 = scmp.eq.s32.totalorder %s9, 3
    %p45 = por %p43, %p44
    %p46 = scmp.ne.s32.totalorder %s38, %s41
    %p47 = scmp.eq.s32.totalorder %s9, 0
    %p48 = por %p46, %p47
    %p49 = scmp.ne.s32.totalorder %s38, %s41
    %p50 = scmp.eq.s32.totalorder %s14, 3
    %p51 = por %p49, %p50
    %p52 = scmp.ne.s32.totalorder %s41, %s42
    %p53 = scmp.eq.s32.totalorder %s14, 0
    %p54 = por %p52, %p53
    %p55 = scmp.ne.s32.totalorder %s41, %s42
    %p56 = scmp.eq.s32.totalorder %s15, 3
    %p57 = por %p55, %p56
    %p59 = scmp.ne.s32.totalorder %s42, %s58
    %p60 = scmp.eq.s32.totalorder %s15, 0
    %p61 = por %p59, %p60
    %s62 = ssub.s32 %s16, %s35
    %s63 = ssub.s32 %s18, %s27
    %s64 = sor.u32 %s62, %s63
    %p65 = scmp.eq.s32.totalorder %s64, 0
    %s67 = sadd.s32 %s66, 1
    %s68 = scalar_select %p65, %s66, %s67
    %p71 = pneg %p65
    %p72 = scmp.eq.s32.totalorder %s9, 3
    %p73 = por %p71, %p72
    %p74 = scmp.ne.s32.totalorder %s66, %s69
    %p75 = scmp.eq.s32.totalorder %s9, 0
    %p76 = por %p74, %p75
    %p77 = scmp.ne.s32.totalorder %s66, %s69
    %p78 = scmp.eq.s32.totalorder %s14, 3
    %p79 = por %p77, %p78
    %p80 = scmp.ne.s32.totalorder %s69, %s70
    %p81 = scmp.eq.s32.totalorder %s14, 0
    %p82 = por %p80, %p81
    %p83 = scmp.ne.s32.totalorder %s69, %s70
    %p84 = scmp.eq.s32.totalorder %s15, 3
    %p85 = por %p83, %p84
    %p87 = scmp.ne.s32.totalorder %s70, %s86
    %p88 = scmp.eq.s32.totalorder %s15, 0
    %p89 = por %p87, %p88
    %s90 = ssub.s32 %s16, %s35
    %s91 = ssub.s32 %s18, %s27
    %s92 = sor.u32 %s90, %s91
    %p93 = scmp.eq.s32.totalorder %s92, 0
    %s95 = sadd.s32 %s94, 1
    %s96 = scalar_select %p93, %s94, %s95
    %p99 = pneg %p93
    %p100 = scmp.eq.s32.totalorder %s9, 3
    %p101 = por %p99, %p100
    %p102 = scmp.ne.s32.totalorder %s94, %s97
    %p103 = scmp.eq.s32.totalorder %s9, 0
    %p104 = por %p102, %p103
    %p105 = scmp.ne.s32.totalorder %s94, %s97
    %p106 = scmp.eq.s32.totalorder %s14, 3
    %p107 = por %p105, %p106
    %p108 = scmp.ne.s32.totalorder %s97, %s98
    %p109 = scmp.eq.s32.totalorder %s14, 0
    %p110 = por %p108, %p109
    %p111 = scmp.ne.s32.totalorder %s97, %s98
    %p112 = scmp.eq.s32.totalorder %s15, 3
    %p113 = por %p111, %p112
    %p115 = scmp.ne.s32.totalorder %s98, %s114
    %p116 = scmp.eq.s32.totalorder %s15, 0
    %p117 = por %p115, %p116
    %s118 = ssub.s32 %s16, %s35
    %s119 = ssub.s32 %s17, %s31
    %s120 = sor.u32 %s118, %s119
    %p121 = scmp.eq.s32.totalorder %s120, 0
    %s123 = sadd.s32 %s122, 1
    %s124 = scalar_select %p121, %s122, %s123
    %p127 = pneg %p121
    %p128 = scmp.eq.s32.totalorder %s9, 3
    %p129 = por %p127, %p128
    %p130 = scmp.ne.s32.totalorder %s122, %s125
    %p131 = scmp.eq.s32.totalorder %s9, 0
    %p132 = por %p130, %p131
    %p133 = scmp.ne.s32.totalorder %s122, %s125
    %p134 = scmp.eq.s32.totalorder %s14, 3
    %p135 = por %p133, %p134
    %p136 = scmp.ne.s32.totalorder %s125, %s126
    %p137 = scmp.eq.s32.totalorder %s14, 0
    %p138 = por %p136, %p137
    %p139 = scmp.ne.s32.totalorder %s125, %s126
    %p140 = scmp.eq.s32.totalorder %s15, 3
    %p141 = por %p139, %p140
    %p143 = scmp.ne.s32.totalorder %s126, %s142
    %p144 = scmp.eq.s32.totalorder %s15, 0
    %p145 = por %p143, %p144
    %p146 = scmp.le.s32.totalorder 1, %s9
    %p147 = scmp.lt.s32.totalorder %s9, 5
    %p148 = pnand %p146, %p147
    %p149 = pneg %p148
    // Predicated region
    $region9: #{tpu_custom_call.1} parent=5 // pred_check
      _
    $region10: #{tpu_custom_call.1} parent=5 // pred_check_branch
      %151 = sbr.rel (%p148) target = $region12
    $region11: #{tpu_custom_call.1} parent=5 // pred_region
      %s152 = ssub.s32 %s9, 1
    $region12: #{tpu_custom_call.1} parent=5 // pred_fallthru
      _
    %p153 = scmp.lt.s32.totalorder %s9, 4
    // Predicated region
    $region13: #{tpu_custom_call.1} parent=5 // pred_check
      %p154 = pneg %p153
    $region14: #{tpu_custom_call.1} parent=5 // pred_check_branch
      %156 = sbr.rel (%p154) target = $region16
    $region15: #{tpu_custom_call.1} parent=5 // pred_region
      // Predicated region
      $region17: #{tpu_custom_call.1} parent=15 // pred_check
        %p157 = pneg %p48
      $region18: #{tpu_custom_call.1} parent=15 // pred_check_branch
        %159 = sbr.rel (%p157) target = $region20
      $region19: #{tpu_custom_call.1} parent=15 // pred_region
        %p160 = scmp.lt.s32.totalorder %s17, 1
        %s161 = scalar_select %p160, %s17, 1
        %s162 = smul.addr %s161, 2
        %s163 = scalar_lea.vmem %s0, %s162
      $region20: #{tpu_custom_call.1} parent=15 // pred_fallthru
        _
      // Predicated region
      $region21: #{tpu_custom_call.1} parent=15 // pred_check
        %p164 = pneg %p76
      $region22: #{tpu_custom_call.1} parent=15 // pred_check_branch
        %166 = sbr.rel (%p164) target = $region24
      $region23: #{tpu_custom_call.1} parent=15 // pred_region
        %s167 = smul.u32 16, %s18
        %p168 = scmp.lt.s32.totalorder %s16, 1
        %s169 = scalar_select %p168, %s16, 1
        %p170 = scmp.lt.s32.totalorder %s167, 15
        %s171 = scalar_select %p170, %s167, 15
        %s172 = smul.addr %s169, 16
        %s173 = sadd.s32 %s171, %s172
        %s174 = smul.addr %s173, 8
        %s175 = scalar_lea.vmem %s1, %s174
        %s176 = smul.u32 16, %s18
      $region24: #{tpu_custom_call.1} parent=15 // pred_fallthru
        _
      // Predicated region
      $region25: #{tpu_custom_call.1} parent=15 // pred_check
        %p177 = pneg %p104
      $region26: #{tpu_custom_call.1} parent=15 // pred_check_branch
        %179 = sbr.rel (%p177) target = $region28
      $region27: #{tpu_custom_call.1} parent=15 // pred_region
        %p180 = scmp.lt.s32.totalorder %s16, 1
        %s181 = scalar_select %p180, %s16, 1
        %p182 = scmp.lt.s32.totalorder %s18, 0
        %s183 = scalar_select %p182, %s18, 0
        %s184 = smul.addr %s181, 3
        %s185 = sadd.s32 %s183, %s184
        %s186 = smul.addr %s185, 8
        %s187 = scalar_lea.vmem %s2, %s186
      $region28: #{tpu_custom_call.1} parent=15 // pred_fallthru
        _
    $region16: #{tpu_custom_call.1} parent=5 // pred_fallthru
      _
    %p188 = scmp.le.s32.totalorder 1, %s9
    %p189 = scmp.lt.s32.totalorder %s9, 5
    %p190 = pnand %p188, %p189
    %p191 = pneg %p190
    // Predicated region
    $region29: #{tpu_custom_call.1} parent=5 // pred_check
      _
    $region30: #{tpu_custom_call.1} parent=5 // pred_check_branch
      %193 = sbr.rel (%p190) target = $region32
    $region31: #{tpu_custom_call.1} parent=5 // pred_region
      %s194 = ssub.s32 %s9, 1
      %p195 = scmp.lt.s32.totalorder %s20, 1
      %s196 = scalar_select %p195, %s20, 1
      %s197 = smul.addr %s196, 2
      %s198 = scalar_lea.vmem %s0, %s197
      %p199 = pneg %p54
      %p200 = pneg %p51
      %s201 = smul.u32 16, %s21
      %p202 = scmp.lt.s32.totalorder %s19, 1
      %s203 = scalar_select %p202, %s19, 1
      %p204 = scmp.lt.s32.totalorder %s201, 15
      %s205 = scalar_select %p204, %s201, 15
      %s206 = smul.addr %s203, 16
      %s207 = sadd.s32 %s205, %s206
      %s208 = smul.addr %s207, 8
      %s209 = scalar_lea.vmem %s1, %s208
      %p210 = pneg %p82
      %p211 = pneg %p79
      %p212 = scmp.lt.s32.totalorder %s19, 1
      %s213 = scalar_select %p212, %s19, 1
      %p214 = scmp.lt.s32.totalorder %s21, 0
      %s215 = scalar_select %p214, %s21, 0
      %s216 = smul.addr %s213, 3
      %s217 = sadd.s32 %s215, %s216
      %s218 = smul.addr %s217, 8
      %s219 = scalar_lea.vmem %s2, %s218
      %p220 = pneg %p110
      %p221 = pneg %p107
      %p222 = pneg %p138
      %p223 = pneg %p135
      %p224 = scmp.lt.s32.totalorder %s19, 1
      %s225 = scalar_select %p224, %s19, 1
      %p226 = scmp.lt.s32.totalorder %s20, 1
      %s227 = scalar_select %p226, %s20, 1
      %s228 = smul.addr %s225, 2
      %s229 = sadd.s32 %s227, %s228
      %s230 = smul.addr %s229, 8
      %s231 = scalar_lea.vmem %s3, %s230
      %p232 = scmp.lt.s32.totalorder %s20, 1
      %s233 = scalar_select %p232, %s20, 1
      %s234 = smul.addr %s233, 2
      %s235 = scalar_lea.vmem %s0, %s234
      %s236 = smul.u32 16, %s21
      %p237 = scmp.lt.s32.totalorder %s19, 1
      %s238 = scalar_select %p237, %s19, 1
      %p239 = scmp.lt.s32.totalorder %s236, 15
      %s240 = scalar_select %p239, %s236, 15
      %s241 = smul.addr %s238, 16
      %s242 = sadd.s32 %s240, %s241
      %s243 = smul.addr %s242, 8
      %s244 = scalar_lea.vmem %s1, %s243
      %s245 = smul.u32 16, %s21
      %p246 = scmp.lt.s32.totalorder %s19, 1
      %s247 = scalar_select %p246, %s19, 1
      %p248 = scmp.lt.s32.totalorder %s21, 0
      %s249 = scalar_select %p248, %s21, 0
      %s250 = smul.addr %s247, 3
      %s251 = sadd.s32 %s249, %s250
      %s252 = smul.addr %s251, 8
      %s253 = scalar_lea.vmem %s2, %s252
      %p254 = scmp.lt.s32.totalorder %s19, 1
      %s255 = scalar_select %p254, %s19, 1
      %p256 = scmp.lt.s32.totalorder %s20, 1
      %s257 = scalar_select %p256, %s20, 1
      %s258 = smul.addr %s255, 2
      %s259 = sadd.s32 %s257, %s258
      %s260 = smul.addr %s259, 8
      %s261 = scalar_lea.vmem %s3, %s260
      %p262 = scmp.eq.s32.totalorder %s21, 0
      // Predicated region
      $region33: #{tpu_custom_call.1} parent=31 // pred_check
        %p263 = pneg %p262
      $region34: #{tpu_custom_call.1} parent=31 // pred_check_branch
        %265 = sbr.rel (%p263) target = $region36
      $region35: #{tpu_custom_call.1} parent=31 // pred_region
        %266 = vst [vmem:[#allocation2] sm:$0x1] inf
        %267 = vst [vmem:[%s261] sm:$0x1f] 0.0
      $region36: #{tpu_custom_call.1} parent=31 // pred_fallthru
        _
      %v268 = vld [vmem:[%s235] sm:$0x1]
      %v269 = vld [vmem:[%s235 + $0x1] sm:$0x1]
      %v270 = vld [vmem:[%s244] sm:$0xff]
      %v271 = vld [vmem:[%s244 + $0x8] sm:$0xff]
      %v272 = vld [vmem:[%s244 + $0x10] sm:$0xff]
      %v273 = vld [vmem:[%s244 + $0x18] sm:$0xff]
      %v274 = vld [vmem:[%s244 + $0x20] sm:$0xff]
      %v275 = vld [vmem:[%s244 + $0x28] sm:$0xff]
      %v276 = vld [vmem:[%s244 + $0x30] sm:$0xff]
      %v277 = vld [vmem:[%s244 + $0x38] sm:$0xff]
      %v278 = vld [vmem:[%s244 + $0x40] sm:$0xff]
      %v279 = vld [vmem:[%s244 + $0x48] sm:$0xff]
      %v280 = vld [vmem:[%s244 + $0x50] sm:$0xff]
      %v281 = vld [vmem:[%s244 + $0x58] sm:$0xff]
      %v282 = vld [vmem:[%s244 + $0x60] sm:$0xff]
      %v283 = vld [vmem:[%s244 + $0x68] sm:$0xff]
      %v284 = vld [vmem:[%s244 + $0x70] sm:$0xff]
      %v285 = vld [vmem:[%s244 + $0x78] sm:$0xff]
      %vm286 = vcmp.gt.f32.partialorder %v270, 0.5
      %vm287 = vcmp.gt.f32.partialorder %v271, 0.5
      %vm288 = vcmp.gt.f32.partialorder %v272, 0.5
      %vm289 = vcmp.gt.f32.partialorder %v273, 0.5
      %vm290 = vcmp.gt.f32.partialorder %v274, 0.5
      %vm291 = vcmp.gt.f32.partialorder %v275, 0.5
      %vm292 = vcmp.gt.f32.partialorder %v276, 0.5
      %vm293 = vcmp.gt.f32.partialorder %v277, 0.5
      %vm294 = vcmp.gt.f32.partialorder %v278, 0.5
      %vm295 = vcmp.gt.f32.partialorder %v279, 0.5
      %vm296 = vcmp.gt.f32.partialorder %v280, 0.5
      %vm297 = vcmp.gt.f32.partialorder %v281, 0.5
      %vm298 = vcmp.gt.f32.partialorder %v282, 0.5
      %vm299 = vcmp.gt.f32.partialorder %v283, 0.5
      %vm300 = vcmp.gt.f32.partialorder %v284, 0.5
      %vm301 = vcmp.gt.f32.partialorder %v285, 0.5
      %303 = vset.pattern.permute.xlu0 0
      %304 = vperm.xlu0 %303, %v270
      %v305 = vpop.permute.xlu0 %304
      %308 = vset.pattern.permute.xlu0 0
      %309 = vperm.xlu0 %308, %v271
      %v310 = vpop.permute.xlu0 %309
      %313 = vset.pattern.permute.xlu0 0
      %314 = vperm.xlu0 %313, %v272
      %v315 = vpop.permute.xlu0 %314
      %318 = vset.pattern.permute.xlu0 0
      %319 = vperm.xlu0 %318, %v273
      %v320 = vpop.permute.xlu0 %319
      %323 = vset.pattern.permute.xlu0 0
      %324 = vperm.xlu0 %323, %v274
      %v325 = vpop.permute.xlu0 %324
      %328 = vset.pattern.permute.xlu0 0
      %329 = vperm.xlu0 %328, %v275
      %v330 = vpop.permute.xlu0 %329
      %333 = vset.pattern.permute.xlu0 0
      %334 = vperm.xlu0 %333, %v276
      %v335 = vpop.permute.xlu0 %334
      %338 = vset.pattern.permute.xlu0 0
      %339 = vperm.xlu0 %338, %v277
      %v340 = vpop.permute.xlu0 %339
      %343 = vset.pattern.permute.xlu0 0
      %344 = vperm.xlu0 %343, %v278
      %v345 = vpop.permute.xlu0 %344
      %348 = vset.pattern.permute.xlu0 0
      %349 = vperm.xlu0 %348, %v279
      %v350 = vpop.permute.xlu0 %349
      %353 = vset.pattern.permute.xlu0 0
      %354 = vperm.xlu0 %353, %v280
      %v355 = vpop.permute.xlu0 %354
      %358 = vset.pattern.permute.xlu0 0
      %359 = vperm.xlu0 %358, %v281
      %v360 = vpop.permute.xlu0 %359
      %363 = vset.pattern.permute.xlu0 0
      %364 = vperm.xlu0 %363, %v282
      %v365 = vpop.permute.xlu0 %364
      %368 = vset.pattern.permute.xlu0 0
      %369 = vperm.xlu0 %368, %v283
      %v370 = vpop.permute.xlu0 %369
      %373 = vset.pattern.permute.xlu0 0
      %374 = vperm.xlu0 %373, %v284
      %v375 = vpop.permute.xlu0 %374
      %378 = vset.pattern.permute.xlu0 0
      %379 = vperm.xlu0 %378, %v285
      %v380 = vpop.permute.xlu0 %379
      %v382 = vlaneseq
      %v383 = vshrl.u32 %v382, 7
      %v384 = vsub.s32 0, %v383
      %v385 = vrot.slane %v268, %v384
      %v386 = vmul.f32 %v305, %v385
      %v387 = vmul.f32 %v310, %v385
      %v388 = vmul.f32 %v315, %v385
      %v389 = vmul.f32 %v320, %v385
      %v390 = vmul.f32 %v325, %v385
      %v391 = vmul.f32 %v330, %v385
      %v392 = vmul.f32 %v335, %v385
      %v393 = vmul.f32 %v340, %v385
      %v394 = vmul.f32 %v345, %v385
      %v395 = vmul.f32 %v350, %v385
      %v396 = vmul.f32 %v355, %v385
      %v397 = vmul.f32 %v360, %v385
      %v398 = vmul.f32 %v365, %v385
      %v399 = vmul.f32 %v370, %v385
      %v400 = vmul.f32 %v375, %v385
      %v401 = vmul.f32 %v380, %v385
      %402 = vset.pattern.permute.xlu0 1
      %403 = vperm.xlu0 %402, %v270
      %v404 = vpop.permute.xlu0 %403
      %406 = vset.pattern.permute.xlu0 1
      %407 = vperm.xlu0 %406, %v271
      %v408 = vpop.permute.xlu0 %407
      %410 = vset.pattern.permute.xlu0 1
      %411 = vperm.xlu0 %410, %v272
      %v412 = vpop.permute.xlu0 %411
      %414 = vset.pattern.permute.xlu0 1
      %415 = vperm.xlu0 %414, %v273
      %v416 = vpop.permute.xlu0 %415
      %418 = vset.pattern.permute.xlu0 1
      %419 = vperm.xlu0 %418, %v274
      %v420 = vpop.permute.xlu0 %419
      %422 = vset.pattern.permute.xlu0 1
      %423 = vperm.xlu0 %422, %v275
      %v424 = vpop.permute.xlu0 %423
      %426 = vset.pattern.permute.xlu0 1
      %427 = vperm.xlu0 %426, %v276
      %v428 = vpop.permute.xlu0 %427
      %430 = vset.pattern.permute.xlu0 1
      %431 = vperm.xlu0 %430, %v277
      %v432 = vpop.permute.xlu0 %431
      %434 = vset.pattern.permute.xlu0 1
      %435 = vperm.xlu0 %434, %v278
      %v436 = vpop.permute.xlu0 %435
      %438 = vset.pattern.permute.xlu0 1
      %439 = vperm.xlu0 %438, %v279
      %v440 = vpop.permute.xlu0 %439
      %442 = vset.pattern.permute.xlu0 1
      %443 = vperm.xlu0 %442, %v280
      %v444 = vpop.permute.xlu0 %443
      %446 = vset.pattern.permute.xlu0 1
      %447 = vperm.xlu0 %446, %v281
      %v448 = vpop.permute.xlu0 %447
      %450 = vset.pattern.permute.xlu0 1
      %451 = vperm.xlu0 %450, %v282
      %v452 = vpop.permute.xlu0 %451
      %454 = vset.pattern.permute.xlu0 1
      %455 = vperm.xlu0 %454, %v283
      %v456 = vpop.permute.xlu0 %455
      %458 = vset.pattern.permute.xlu0 1
      %459 = vperm.xlu0 %458, %v284
      %v460 = vpop.permute.xlu0 %459
      %462 = vset.pattern.permute.xlu0 1
      %463 = vperm.xlu0 %462, %v285
      %v464 = vpop.permute.xlu0 %463
      %v466 = vlaneseq
      %v467 = vshrl.u32 %v466, 7
      %v468 = vsub.s32 0, %v467
      %v469 = vrot.slane %v269, %v468
      %v470 = vmul.f32 %v404, %v469
      %v471 = vmul.f32 %v408, %v469
      %v472 = vmul.f32 %v412, %v469
      %v473 = vmul.f32 %v416, %v469
      %v474 = vmul.f32 %v420, %v469
      %v475 = vmul.f32 %v424, %v469
      %v476 = vmul.f32 %v428, %v469
      %v477 = vmul.f32 %v432, %v469
      %v478 = vmul.f32 %v436, %v469
      %v479 = vmul.f32 %v440, %v469
      %v480 = vmul.f32 %v444, %v469
      %v481 = vmul.f32 %v448, %v469
      %v482 = vmul.f32 %v452, %v469
      %v483 = vmul.f32 %v456, %v469
      %v484 = vmul.f32 %v460, %v469
      %v485 = vmul.f32 %v464, %v469
      %v486 = vadd.f32 %v386, %v470
      %v487 = vadd.f32 %v387, %v471
      %v488 = vadd.f32 %v388, %v472
      %v489 = vadd.f32 %v389, %v473
      %v490 = vadd.f32 %v390, %v474
      %v491 = vadd.f32 %v391, %v475
      %v492 = vadd.f32 %v392, %v476
      %v493 = vadd.f32 %v393, %v477
      %v494 = vadd.f32 %v394, %v478
      %v495 = vadd.f32 %v395, %v479
      %v496 = vadd.f32 %v396, %v480
      %v497 = vadd.f32 %v397, %v481
      %v498 = vadd.f32 %v398, %v482
      %v499 = vadd.f32 %v399, %v483
      %v500 = vadd.f32 %v400, %v484
      %v501 = vadd.f32 %v401, %v485
      %502 = vset.pattern.permute.xlu0 2
      %503 = vperm.xlu0 %502, %v270
      %v504 = vpop.permute.xlu0 %503
      %506 = vset.pattern.permute.xlu0 2
      %507 = vperm.xlu0 %506, %v271
      %v508 = vpop.permute.xlu0 %507
      %510 = vset.pattern.permute.xlu0 2
      %511 = vperm.xlu0 %510, %v272
      %v512 = vpop.permute.xlu0 %511
      %514 = vset.pattern.permute.xlu0 2
      %515 = vperm.xlu0 %514, %v273
      %v516 = vpop.permute.xlu0 %515
      %518 = vset.pattern.permute.xlu0 2
      %519 = vperm.xlu0 %518, %v274
      %v520 = vpop.permute.xlu0 %519
      %522 = vset.pattern.permute.xlu0 2
      %523 = vperm.xlu0 %522, %v275
      %v524 = vpop.permute.xlu0 %523
      %526 = vset.pattern.permute.xlu0 2
      %527 = vperm.xlu0 %526, %v276
      %v528 = vpop.permute.xlu0 %527
      %530 = vset.pattern.permute.xlu0 2
      %531 = vperm.xlu0 %530, %v277
      %v532 = vpop.permute.xlu0 %531
      %534 = vset.pattern.permute.xlu0 2
      %535 = vperm.xlu0 %534, %v278
      %v536 = vpop.permute.xlu0 %535
      %538 = vset.pattern.permute.xlu0 2
      %539 = vperm.xlu0 %538, %v279
      %v540 = vpop.permute.xlu0 %539
      %542 = vset.pattern.permute.xlu0 2
      %543 = vperm.xlu0 %542, %v280
      %v544 = vpop.permute.xlu0 %543
      %546 = vset.pattern.permute.xlu0 2
      %547 = vperm.xlu0 %546, %v281
      %v548 = vpop.permute.xlu0 %547
      %550 = vset.pattern.permute.xlu0 2
      %551 = vperm.xlu0 %550, %v282
      %v552 = vpop.permute.xlu0 %551
      %554 = vset.pattern.permute.xlu0 2
      %555 = vperm.xlu0 %554, %v283
      %v556 = vpop.permute.xlu0 %555
      %558 = vset.pattern.permute.xlu0 2
      %559 = vperm.xlu0 %558, %v284
      %v560 = vpop.permute.xlu0 %559
      %562 = vset.pattern.permute.xlu0 2
      %563 = vperm.xlu0 %562, %v285
      %v564 = vpop.permute.xlu0 %563
      %v566 = vadd.f32 %v486, %v504
      %v567 = vadd.f32 %v487, %v508
      %v568 = vadd.f32 %v488, %v512
      %v569 = vadd.f32 %v489, %v516
      %v570 = vadd.f32 %v490, %v520
      %v571 = vadd.f32 %v491, %v524
      %v572 = vadd.f32 %v492, %v528
      %v573 = vadd.f32 %v493, %v532
      %v574 = vadd.f32 %v494, %v536
      %v575 = vadd.f32 %v495, %v540
      %v576 = vadd.f32 %v496, %v544
      %v577 = vadd.f32 %v497, %v548
      %v578 = vadd.f32 %v498, %v552
      %v579 = vadd.f32 %v499, %v556
      %v580 = vadd.f32 %v500, %v560
      %v581 = vadd.f32 %v501, %v564
      %582 = vset.pattern.permute.xlu0 3
      %583 = vperm.xlu0 %582, %v270
      %v584 = vpop.permute.xlu0 %583
      %586 = vset.pattern.permute.xlu0 3
      %587 = vperm.xlu0 %586, %v271
      %v588 = vpop.permute.xlu0 %587
      %590 = vset.pattern.permute.xlu0 3
      %591 = vperm.xlu0 %590, %v272
      %v592 = vpop.permute.xlu0 %591
      %594 = vset.pattern.permute.xlu0 3
      %595 = vperm.xlu0 %594, %v273
      %v596 = vpop.permute.xlu0 %595
      %598 = vset.pattern.permute.xlu0 3
      %599 = vperm.xlu0 %598, %v274
      %v600 = vpop.permute.xlu0 %599
      %602 = vset.pattern.permute.xlu0 3
      %603 = vperm.xlu0 %602, %v275
      %v604 = vpop.permute.xlu0 %603
      %606 = vset.pattern.permute.xlu0 3
      %607 = vperm.xlu0 %606, %v276
      %v608 = vpop.permute.xlu0 %607
      %610 = vset.pattern.permute.xlu0 3
      %611 = vperm.xlu0 %610, %v277
      %v612 = vpop.permute.xlu0 %611
      %614 = vset.pattern.permute.xlu0 3
      %615 = vperm.xlu0 %614, %v278
      %v616 = vpop.permute.xlu0 %615
      %618 = vset.pattern.permute.xlu0 3
      %619 = vperm.xlu0 %618, %v279
      %v620 = vpop.permute.xlu0 %619
      %622 = vset.pattern.permute.xlu0 3
      %623 = vperm.xlu0 %622, %v280
      %v624 = vpop.permute.xlu0 %623
      %626 = vset.pattern.permute.xlu0 3
      %627 = vperm.xlu0 %626, %v281
      %v628 = vpop.permute.xlu0 %627
      %630 = vset.pattern.permute.xlu0 3
      %631 = vperm.xlu0 %630, %v282
      %v632 = vpop.permute.xlu0 %631
      %634 = vset.pattern.permute.xlu0 3
      %635 = vperm.xlu0 %634, %v283
      %v636 = vpop.permute.xlu0 %635
      %638 = vset.pattern.permute.xlu0 3
      %639 = vperm.xlu0 %638, %v284
      %v640 = vpop.permute.xlu0 %639
      %642 = vset.pattern.permute.xlu0 3
      %643 = vperm.xlu0 %642, %v285
      %v644 = vpop.permute.xlu0 %643
      %v646 = vmul.f32 %v584, %v385
      %v647 = vmul.f32 %v588, %v385
      %v648 = vmul.f32 %v592, %v385
      %v649 = vmul.f32 %v596, %v385
      %v650 = vmul.f32 %v600, %v385
      %v651 = vmul.f32 %v604, %v385
      %v652 = vmul.f32 %v608, %v385
      %v653 = vmul.f32 %v612, %v385
      %v654 = vmul.f32 %v616, %v385
      %v655 = vmul.f32 %v620, %v385
      %v656 = vmul.f32 %v624, %v385
      %v657 = vmul.f32 %v628, %v385
      %v658 = vmul.f32 %v632, %v385
      %v659 = vmul.f32 %v636, %v385
      %v660 = vmul.f32 %v640, %v385
      %v661 = vmul.f32 %v644, %v385
      %662 = vset.pattern.permute.xlu0 4
      %663 = vperm.xlu0 %662, %v270
      %v664 = vpop.permute.xlu0 %663
      %666 = vset.pattern.permute.xlu0 4
      %667 = vperm.xlu0 %666, %v271
      %v668 = vpop.permute.xlu0 %667
      %670 = vset.pattern.permute.xlu0 4
      %671 = vperm.xlu0 %670, %v272
      %v672 = vpop.permute.xlu0 %671
      %674 = vset.pattern.permute.xlu0 4
      %675 = vperm.xlu0 %674, %v273
      %v676 = vpop.permute.xlu0 %675
      %678 = vset.pattern.permute.xlu0 4
      %679 = vperm.xlu0 %678, %v274
      %v680 = vpop.permute.xlu0 %679
      %682 = vset.pattern.permute.xlu0 4
      %683 = vperm.xlu0 %682, %v275
      %v684 = vpop.permute.xlu0 %683
      %686 = vset.pattern.permute.xlu0 4
      %687 = vperm.xlu0 %686, %v276
      %v688 = vpop.permute.xlu0 %687
      %690 = vset.pattern.permute.xlu0 4
      %691 = vperm.xlu0 %690, %v277
      %v692 = vpop.permute.xlu0 %691
      %694 = vset.pattern.permute.xlu0 4
      %695 = vperm.xlu0 %694, %v278
      %v696 = vpop.permute.xlu0 %695
      %698 = vset.pattern.permute.xlu0 4
      %699 = vperm.xlu0 %698, %v279
      %v700 = vpop.permute.xlu0 %699
      %702 = vset.pattern.permute.xlu0 4
      %703 = vperm.xlu0 %702, %v280
      %v704 = vpop.permute.xlu0 %703
      %706 = vset.pattern.permute.xlu0 4
      %707 = vperm.xlu0 %706, %v281
      %v708 = vpop.permute.xlu0 %707
      %710 = vset.pattern.permute.xlu0 4
      %711 = vperm.xlu0 %710, %v282
      %v712 = vpop.permute.xlu0 %711
      %714 = vset.pattern.permute.xlu0 4
      %715 = vperm.xlu0 %714, %v283
      %v716 = vpop.permute.xlu0 %715
      %718 = vset.pattern.permute.xlu0 4
      %719 = vperm.xlu0 %718, %v284
      %v720 = vpop.permute.xlu0 %719
      %722 = vset.pattern.permute.xlu0 4
      %723 = vperm.xlu0 %722, %v285
      %v724 = vpop.permute.xlu0 %723
      %v726 = vmul.f32 %v664, %v469
      %v727 = vmul.f32 %v668, %v469
      %v728 = vmul.f32 %v672, %v469
      %v729 = vmul.f32 %v676, %v469
      %v730 = vmul.f32 %v680, %v469
      %v731 = vmul.f32 %v684, %v469
      %v732 = vmul.f32 %v688, %v469
      %v733 = vmul.f32 %v692, %v469
      %v734 = vmul.f32 %v696, %v469
      %v735 = vmul.f32 %v700, %v469
      %v736 = vmul.f32 %v704, %v469
      %v737 = vmul.f32 %v708, %v469
      %v738 = vmul.f32 %v712, %v469
      %v739 = vmul.f32 %v716, %v469
      %v740 = vmul.f32 %v720, %v469
      %v741 = vmul.f32 %v724, %v469
      %v742 = vadd.f32 %v646, %v726
      %v743 = vadd.f32 %v647, %v727
      %v744 = vadd.f32 %v648, %v728
      %v745 = vadd.f32 %v649, %v729
      %v746 = vadd.f32 %v650, %v730
      %v747 = vadd.f32 %v651, %v731
      %v748 = vadd.f32 %v652, %v732
      %v749 = vadd.f32 %v653, %v733
      %v750 = vadd.f32 %v654, %v734
      %v751 = vadd.f32 %v655, %v735
      %v752 = vadd.f32 %v656, %v736
      %v753 = vadd.f32 %v657, %v737
      %v754 = vadd.f32 %v658, %v738
      %v755 = vadd.f32 %v659, %v739
      %v756 = vadd.f32 %v660, %v740
      %v757 = vadd.f32 %v661, %v741
      %758 = vset.pattern.permute.xlu0 5
      %759 = vperm.xlu0 %758, %v270
      %v760 = vpop.permute.xlu0 %759
      %762 = vset.pattern.permute.xlu0 5
      %763 = vperm.xlu0 %762, %v271
      %v764 = vpop.permute.xlu0 %763
      %766 = vset.pattern.permute.xlu0 5
      %767 = vperm.xlu0 %766, %v272
      %v768 = vpop.permute.xlu0 %767
      %770 = vset.pattern.permute.xlu0 5
      %771 = vperm.xlu0 %770, %v273
      %v772 = vpop.permute.xlu0 %771
      %774 = vset.pattern.permute.xlu0 5
      %775 = vperm.xlu0 %774, %v274
      %v776 = vpop.permute.xlu0 %775
      %778 = vset.pattern.permute.xlu0 5
      %779 = vperm.xlu0 %778, %v275
      %v780 = vpop.permute.xlu0 %779
      %782 = vset.pattern.permute.xlu0 5
      %783 = vperm.xlu0 %782, %v276
      %v784 = vpop.permute.xlu0 %783
      %786 = vset.pattern.permute.xlu0 5
      %787 = vperm.xlu0 %786, %v277
      %v788 = vpop.permute.xlu0 %787
      %790 = vset.pattern.permute.xlu0 5
      %791 = vperm.xlu0 %790, %v278
      %v792 = vpop.permute.xlu0 %791
      %794 = vset.pattern.permute.xlu0 5
      %795 = vperm.xlu0 %794, %v279
      %v796 = vpop.permute.xlu0 %795
      %798 = vset.pattern.permute.xlu0 5
      %799 = vperm.xlu0 %798, %v280
      %v800 = vpop.permute.xlu0 %799
      %802 = vset.pattern.permute.xlu0 5
      %803 = vperm.xlu0 %802, %v281
      %v804 = vpop.permute.xlu0 %803
      %806 = vset.pattern.permute.xlu0 5
      %807 = vperm.xlu0 %806, %v282
      %v808 = vpop.permute.xlu0 %807
      %810 = vset.pattern.permute.xlu0 5
      %811 = vperm.xlu0 %810, %v283
      %v812 = vpop.permute.xlu0 %811
      %814 = vset.pattern.permute.xlu0 5
      %815 = vperm.xlu0 %814, %v284
      %v816 = vpop.permute.xlu0 %815
      %818 = vset.pattern.permute.xlu0 5
      %819 = vperm.xlu0 %818, %v285
      %v820 = vpop.permute.xlu0 %819
      %v822 = vadd.f32 %v742, %v760
      %v823 = vadd.f32 %v743, %v764
      %v824 = vadd.f32 %v744, %v768
      %v825 = vadd.f32 %v745, %v772
      %v826 = vadd.f32 %v746, %v776
      %v827 = vadd.f32 %v747, %v780
      %v828 = vadd.f32 %v748, %v784
      %v829 = vadd.f32 %v749, %v788
      %v830 = vadd.f32 %v750, %v792
      %v831 = vadd.f32 %v751, %v796
      %v832 = vadd.f32 %v752, %v800
      %v833 = vadd.f32 %v753, %v804
      %v834 = vadd.f32 %v754, %v808
      %v835 = vadd.f32 %v755, %v812
      %v836 = vadd.f32 %v756, %v816
      %v837 = vadd.f32 %v757, %v820
      %838 = vset.pattern.permute.xlu0 6
      %839 = vperm.xlu0 %838, %v270
      %v840 = vpop.permute.xlu0 %839
      %842 = vset.pattern.permute.xlu0 6
      %843 = vperm.xlu0 %842, %v271
      %v844 = vpop.permute.xlu0 %843
      %846 = vset.pattern.permute.xlu0 6
      %847 = vperm.xlu0 %846, %v272
      %v848 = vpop.permute.xlu0 %847
      %850 = vset.pattern.permute.xlu0 6
      %851 = vperm.xlu0 %850, %v273
      %v852 = vpop.permute.xlu0 %851
      %854 = vset.pattern.permute.xlu0 6
      %855 = vperm.xlu0 %854, %v274
      %v856 = vpop.permute.xlu0 %855
      %858 = vset.pattern.permute.xlu0 6
      %859 = vperm.xlu0 %858, %v275
      %v860 = vpop.permute.xlu0 %859
      %862 = vset.pattern.permute.xlu0 6
      %863 = vperm.xlu0 %862, %v276
      %v864 = vpop.permute.xlu0 %863
      %866 = vset.pattern.permute.xlu0 6
      %867 = vperm.xlu0 %866, %v277
      %v868 = vpop.permute.xlu0 %867
      %870 = vset.pattern.permute.xlu0 6
      %871 = vperm.xlu0 %870, %v278
      %v872 = vpop.permute.xlu0 %871
      %874 = vset.pattern.permute.xlu0 6
      %875 = vperm.xlu0 %874, %v279
      %v876 = vpop.permute.xlu0 %875
      %878 = vset.pattern.permute.xlu0 6
      %879 = vperm.xlu0 %878, %v280
      %v880 = vpop.permute.xlu0 %879
      %882 = vset.pattern.permute.xlu0 6
      %883 = vperm.xlu0 %882, %v281
      %v884 = vpop.permute.xlu0 %883
      %886 = vset.pattern.permute.xlu0 6
      %887 = vperm.xlu0 %886, %v282
      %v888 = vpop.permute.xlu0 %887
      %890 = vset.pattern.permute.xlu0 6
      %891 = vperm.xlu0 %890, %v283
      %v892 = vpop.permute.xlu0 %891
      %894 = vset.pattern.permute.xlu0 6
      %895 = vperm.xlu0 %894, %v284
      %v896 = vpop.permute.xlu0 %895
      %898 = vset.pattern.permute.xlu0 6
      %899 = vperm.xlu0 %898, %v285
      %v900 = vpop.permute.xlu0 %899
      %v902 = vmul.f32 %v840, %v385
      %v903 = vmul.f32 %v844, %v385
      %v904 = vmul.f32 %v848, %v385
      %v905 = vmul.f32 %v852, %v385
      %v906 = vmul.f32 %v856, %v385
      %v907 = vmul.f32 %v860, %v385
      %v908 = vmul.f32 %v864, %v385
      %v909 = vmul.f32 %v868, %v385
      %v910 = vmul.f32 %v872, %v385
      %v911 = vmul.f32 %v876, %v385
      %v912 = vmul.f32 %v880, %v385
      %v913 = vmul.f32 %v884, %v385
      %v914 = vmul.f32 %v888, %v385
      %v915 = vmul.f32 %v892, %v385
      %v916 = vmul.f32 %v896, %v385
      %v917 = vmul.f32 %v900, %v385
      %918 = vset.pattern.permute.xlu0 7
      %919 = vperm.xlu0 %918, %v270
      %v920 = vpop.permute.xlu0 %919
      %922 = vset.pattern.permute.xlu0 7
      %923 = vperm.xlu0 %922, %v271
      %v924 = vpop.permute.xlu0 %923
      %926 = vset.pattern.permute.xlu0 7
      %927 = vperm.xlu0 %926, %v272
      %v928 = vpop.permute.xlu0 %927
      %930 = vset.pattern.permute.xlu0 7
      %931 = vperm.xlu0 %930, %v273
      %v932 = vpop.permute.xlu0 %931
      %934 = vset.pattern.permute.xlu0 7
      %935 = vperm.xlu0 %934, %v274
      %v936 = vpop.permute.xlu0 %935
      %938 = vset.pattern.permute.xlu0 7
      %939 = vperm.xlu0 %938, %v275
      %v940 = vpop.permute.xlu0 %939
      %942 = vset.pattern.permute.xlu0 7
      %943 = vperm.xlu0 %942, %v276
      %v944 = vpop.permute.xlu0 %943
      %946 = vset.pattern.permute.xlu0 7
      %947 = vperm.xlu0 %946, %v277
      %v948 = vpop.permute.xlu0 %947
      %950 = vset.pattern.permute.xlu0 7
      %951 = vperm.xlu0 %950, %v278
      %v952 = vpop.permute.xlu0 %951
      %954 = vset.pattern.permute.xlu0 7
      %955 = vperm.xlu0 %954, %v279
      %v956 = vpop.permute.xlu0 %955
      %958 = vset.pattern.permute.xlu0 7
      %959 = vperm.xlu0 %958, %v280
      %v960 = vpop.permute.xlu0 %959
      %962 = vset.pattern.permute.xlu0 7
      %963 = vperm.xlu0 %962, %v281
      %v964 = vpop.permute.xlu0 %963
      %966 = vset.pattern.permute.xlu0 7
      %967 = vperm.xlu0 %966, %v282
      %v968 = vpop.permute.xlu0 %967
      %970 = vset.pattern.permute.xlu0 7
      %971 = vperm.xlu0 %970, %v283
      %v972 = vpop.permute.xlu0 %971
      %974 = vset.pattern.permute.xlu0 7
      %975 = vperm.xlu0 %974, %v284
      %v976 = vpop.permute.xlu0 %975
      %978 = vset.pattern.permute.xlu0 7
      %979 = vperm.xlu0 %978, %v285
      %v980 = vpop.permute.xlu0 %979
      %v982 = vmul.f32 %v920, %v469
      %v983 = vmul.f32 %v924, %v469
      %v984 = vmul.f32 %v928, %v469
      %v985 = vmul.f32 %v932, %v469
      %v986 = vmul.f32 %v936, %v469
      %v987 = vmul.f32 %v940, %v469
      %v988 = vmul.f32 %v944, %v469
      %v989 = vmul.f32 %v948, %v469
      %v990 = vmul.f32 %v952, %v469
      %v991 = vmul.f32 %v956, %v469
      %v992 = vmul.f32 %v960, %v469
      %v993 = vmul.f32 %v964, %v469
      %v994 = vmul.f32 %v968, %v469
      %v995 = vmul.f32 %v972, %v469
      %v996 = vmul.f32 %v976, %v469
      %v997 = vmul.f32 %v980, %v469
      %v998 = vadd.f32 %v902, %v982
      %v999 = vadd.f32 %v903, %v983
      %v1000 = vadd.f32 %v904, %v984
      %v1001 = vadd.f32 %v905, %v985
      %v1002 = vadd.f32 %v906, %v986
      %v1003 = vadd.f32 %v907, %v987
      %v1004 = vadd.f32 %v908, %v988
      %v1005 = vadd.f32 %v909, %v989
      %v1006 = vadd.f32 %v910, %v990
      %v1007 = vadd.f32 %v911, %v991
      %v1008 = vadd.f32 %v912, %v992
      %v1009 = vadd.f32 %v913, %v993
      %v1010 = vadd.f32 %v914, %v994
      %v1011 = vadd.f32 %v915, %v995
      %v1012 = vadd.f32 %v916, %v996
      %v1013 = vadd.f32 %v917, %v997
      %1014 = vset.pattern.permute.xlu0 8
      %1015 = vperm.xlu0 %1014, %v270
      %v1016 = vpop.permute.xlu0 %1015
      %1018 = vset.pattern.permute.xlu0 8
      %1019 = vperm.xlu0 %1018, %v271
      %v1020 = vpop.permute.xlu0 %1019
      %1022 = vset.pattern.permute.xlu0 8
      %1023 = vperm.xlu0 %1022, %v272
      %v1024 = vpop.permute.xlu0 %1023
      %1026 = vset.pattern.permute.xlu0 8
      %1027 = vperm.xlu0 %1026, %v273
      %v1028 = vpop.permute.xlu0 %1027
      %1030 = vset.pattern.permute.xlu0 8
      %1031 = vperm.xlu0 %1030, %v274
      %v1032 = vpop.permute.xlu0 %1031
      %1034 = vset.pattern.permute.xlu0 8
      %1035 = vperm.xlu0 %1034, %v275
      %v1036 = vpop.permute.xlu0 %1035
      %1038 = vset.pattern.permute.xlu0 8
      %1039 = vperm.xlu0 %1038, %v276
      %v1040 = vpop.permute.xlu0 %1039
      %1042 = vset.pattern.permute.xlu0 8
      %1043 = vperm.xlu0 %1042, %v277
      %v1044 = vpop.permute.xlu0 %1043
      %1046 = vset.pattern.permute.xlu0 8
      %1047 = vperm.xlu0 %1046, %v278
      %v1048 = vpop.permute.xlu0 %1047
      %1050 = vset.pattern.permute.xlu0 8
      %1051 = vperm.xlu0 %1050, %v279
      %v1052 = vpop.permute.xlu0 %1051
      %1054 = vset.pattern.permute.xlu0 8
      %1055 = vperm.xlu0 %1054, %v280
      %v1056 = vpop.permute.xlu0 %1055
      %1058 = vset.pattern.permute.xlu0 8
      %1059 = vperm.xlu0 %1058, %v281
      %v1060 = vpop.permute.xlu0 %1059
      %1062 = vset.pattern.permute.xlu0 8
      %1063 = vperm.xlu0 %1062, %v282
      %v1064 = vpop.permute.xlu0 %1063
      %1066 = vset.pattern.permute.xlu0 8
      %1067 = vperm.xlu0 %1066, %v283
      %v1068 = vpop.permute.xlu0 %1067
      %1070 = vset.pattern.permute.xlu0 8
      %1071 = vperm.xlu0 %1070, %v284
      %v1072 = vpop.permute.xlu0 %1071
      %1074 = vset.pattern.permute.xlu0 8
      %1075 = vperm.xlu0 %1074, %v285
      %v1076 = vpop.permute.xlu0 %1075
      %v1078 = vadd.f32 %v998, %v1016
      %v1079 = vadd.f32 %v999, %v1020
      %v1080 = vadd.f32 %v1000, %v1024
      %v1081 = vadd.f32 %v1001, %v1028
      %v1082 = vadd.f32 %v1002, %v1032
      %v1083 = vadd.f32 %v1003, %v1036
      %v1084 = vadd.f32 %v1004, %v1040
      %v1085 = vadd.f32 %v1005, %v1044
      %v1086 = vadd.f32 %v1006, %v1048
      %v1087 = vadd.f32 %v1007, %v1052
      %v1088 = vadd.f32 %v1008, %v1056
      %v1089 = vadd.f32 %v1009, %v1060
      %v1090 = vadd.f32 %v1010, %v1064
      %v1091 = vadd.f32 %v1011, %v1068
      %v1092 = vadd.f32 %v1012, %v1072
      %v1093 = vadd.f32 %v1013, %v1076
      %vm1094 = vcmp.gt.f32.partialorder %v566, 0.0
      %vm1095 = vcmp.gt.f32.partialorder %v567, 0.0
      %vm1096 = vcmp.gt.f32.partialorder %v568, 0.0
      %vm1097 = vcmp.gt.f32.partialorder %v569, 0.0
      %vm1098 = vcmp.gt.f32.partialorder %v570, 0.0
      %vm1099 = vcmp.gt.f32.partialorder %v571, 0.0
      %vm1100 = vcmp.gt.f32.partialorder %v572, 0.0
      %vm1101 = vcmp.gt.f32.partialorder %v573, 0.0
      %vm1102 = vcmp.gt.f32.partialorder %v574, 0.0
      %vm1103 = vcmp.gt.f32.partialorder %v575, 0.0
      %vm1104 = vcmp.gt.f32.partialorder %v576, 0.0
      %vm1105 = vcmp.gt.f32.partialorder %v577, 0.0
      %vm1106 = vcmp.gt.f32.partialorder %v578, 0.0
      %vm1107 = vcmp.gt.f32.partialorder %v579, 0.0
      %vm1108 = vcmp.gt.f32.partialorder %v580, 0.0
      %vm1109 = vcmp.gt.f32.partialorder %v581, 0.0
      %vm1110 = vcmp.gt.f32.partialorder %v822, 0.0
      %vm1111 = vcmp.gt.f32.partialorder %v823, 0.0
      %vm1112 = vcmp.gt.f32.partialorder %v824, 0.0
      %vm1113 = vcmp.gt.f32.partialorder %v825, 0.0
      %vm1114 = vcmp.gt.f32.partialorder %v826, 0.0
      %vm1115 = vcmp.gt.f32.partialorder %v827, 0.0
      %vm1116 = vcmp.gt.f32.partialorder %v828, 0.0
      %vm1117 = vcmp.gt.f32.partialorder %v829, 0.0
      %vm1118 = vcmp.gt.f32.partialorder %v830, 0.0
      %vm1119 = vcmp.gt.f32.partialorder %v831, 0.0
      %vm1120 = vcmp.gt.f32.partialorder %v832, 0.0
      %vm1121 = vcmp.gt.f32.partialorder %v833, 0.0
      %vm1122 = vcmp.gt.f32.partialorder %v834, 0.0
      %vm1123 = vcmp.gt.f32.partialorder %v835, 0.0
      %vm1124 = vcmp.gt.f32.partialorder %v836, 0.0
      %vm1125 = vcmp.gt.f32.partialorder %v837, 0.0
      %vm1126 = vmand %vm1094, %vm1110
      %vm1127 = vmand %vm1095, %vm1111
      %vm1128 = vmand %vm1096, %vm1112
      %vm1129 = vmand %vm1097, %vm1113
      %vm1130 = vmand %vm1098, %vm1114
      %vm1131 = vmand %vm1099, %vm1115
      %vm1132 = vmand %vm1100, %vm1116
      %vm1133 = vmand %vm1101, %vm1117
      %vm1134 = vmand %vm1102, %vm1118
      %vm1135 = vmand %vm1103, %vm1119
      %vm1136 = vmand %vm1104, %vm1120
      %vm1137 = vmand %vm1105, %vm1121
      %vm1138 = vmand %vm1106, %vm1122
      %vm1139 = vmand %vm1107, %vm1123
      %vm1140 = vmand %vm1108, %vm1124
      %vm1141 = vmand %vm1109, %vm1125
      %vm1142 = vcmp.gt.f32.partialorder %v1078, 0.0
      %vm1143 = vcmp.gt.f32.partialorder %v1079, 0.0
      %vm1144 = vcmp.gt.f32.partialorder %v1080, 0.0
      %vm1145 = vcmp.gt.f32.partialorder %v1081, 0.0
      %vm1146 = vcmp.gt.f32.partialorder %v1082, 0.0
      %vm1147 = vcmp.gt.f32.partialorder %v1083, 0.0
      %vm1148 = vcmp.gt.f32.partialorder %v1084, 0.0
      %vm1149 = vcmp.gt.f32.partialorder %v1085, 0.0
      %vm1150 = vcmp.gt.f32.partialorder %v1086, 0.0
      %vm1151 = vcmp.gt.f32.partialorder %v1087, 0.0
      %vm1152 = vcmp.gt.f32.partialorder %v1088, 0.0
      %vm1153 = vcmp.gt.f32.partialorder %v1089, 0.0
      %vm1154 = vcmp.gt.f32.partialorder %v1090, 0.0
      %vm1155 = vcmp.gt.f32.partialorder %v1091, 0.0
      %vm1156 = vcmp.gt.f32.partialorder %v1092, 0.0
      %vm1157 = vcmp.gt.f32.partialorder %v1093, 0.0
      %vm1158 = vmand %vm1126, %vm1142
      %vm1159 = vmand %vm1127, %vm1143
      %vm1160 = vmand %vm1128, %vm1144
      %vm1161 = vmand %vm1129, %vm1145
      %vm1162 = vmand %vm1130, %vm1146
      %vm1163 = vmand %vm1131, %vm1147
      %vm1164 = vmand %vm1132, %vm1148
      %vm1165 = vmand %vm1133, %vm1149
      %vm1166 = vmand %vm1134, %vm1150
      %vm1167 = vmand %vm1135, %vm1151
      %vm1168 = vmand %vm1136, %vm1152
      %vm1169 = vmand %vm1137, %vm1153
      %vm1170 = vmand %vm1138, %vm1154
      %vm1171 = vmand %vm1139, %vm1155
      %vm1172 = vmand %vm1140, %vm1156
      %vm1173 = vmand %vm1141, %vm1157
      %v1174 = vsel %vm286, 1, 0
      %v1175 = vsel %vm287, 1, 0
      %v1176 = vsel %vm288, 1, 0
      %v1177 = vsel %vm289, 1, 0
      %v1178 = vsel %vm290, 1, 0
      %v1179 = vsel %vm291, 1, 0
      %v1180 = vsel %vm292, 1, 0
      %v1181 = vsel %vm293, 1, 0
      %v1182 = vsel %vm294, 1, 0
      %v1183 = vsel %vm295, 1, 0
      %v1184 = vsel %vm296, 1, 0
      %v1185 = vsel %vm297, 1, 0
      %v1186 = vsel %vm298, 1, 0
      %v1187 = vsel %vm299, 1, 0
      %v1188 = vsel %vm300, 1, 0
      %v1189 = vsel %vm301, 1, 0
      %1190 = vset.pattern.permute.xlu0 15
      %1191 = vperm.xlu0 %1190, %v1174
      %v1192 = vpop.permute.xlu0 %1191
      %1193 = vset.pattern.permute.xlu0 15
      %1194 = vperm.xlu0 %1193, %v1175
      %v1195 = vpop.permute.xlu0 %1194
      %1196 = vset.pattern.permute.xlu0 15
      %1197 = vperm.xlu0 %1196, %v1176
      %v1198 = vpop.permute.xlu0 %1197
      %1199 = vset.pattern.permute.xlu0 15
      %1200 = vperm.xlu0 %1199, %v1177
      %v1201 = vpop.permute.xlu0 %1200
      %1202 = vset.pattern.permute.xlu0 15
      %1203 = vperm.xlu0 %1202, %v1178
      %v1204 = vpop.permute.xlu0 %1203
      %1205 = vset.pattern.permute.xlu0 15
      %1206 = vperm.xlu0 %1205, %v1179
      %v1207 = vpop.permute.xlu0 %1206
      %1208 = vset.pattern.permute.xlu0 15
      %1209 = vperm.xlu0 %1208, %v1180
      %v1210 = vpop.permute.xlu0 %1209
      %1211 = vset.pattern.permute.xlu0 15
      %1212 = vperm.xlu0 %1211, %v1181
      %v1213 = vpop.permute.xlu0 %1212
      %1214 = vset.pattern.permute.xlu0 15
      %1215 = vperm.xlu0 %1214, %v1182
      %v1216 = vpop.permute.xlu0 %1215
      %1217 = vset.pattern.permute.xlu0 15
      %1218 = vperm.xlu0 %1217, %v1183
      %v1219 = vpop.permute.xlu0 %1218
      %1220 = vset.pattern.permute.xlu0 15
      %1221 = vperm.xlu0 %1220, %v1184
      %v1222 = vpop.permute.xlu0 %1221
      %1223 = vset.pattern.permute.xlu0 15
      %1224 = vperm.xlu0 %1223, %v1185
      %v1225 = vpop.permute.xlu0 %1224
      %1226 = vset.pattern.permute.xlu0 15
      %1227 = vperm.xlu0 %1226, %v1186
      %v1228 = vpop.permute.xlu0 %1227
      %1229 = vset.pattern.permute.xlu0 15
      %1230 = vperm.xlu0 %1229, %v1187
      %v1231 = vpop.permute.xlu0 %1230
      %1232 = vset.pattern.permute.xlu0 15
      %1233 = vperm.xlu0 %1232, %v1188
      %v1234 = vpop.permute.xlu0 %1233
      %1235 = vset.pattern.permute.xlu0 15
      %1236 = vperm.xlu0 %1235, %v1189
      %v1237 = vpop.permute.xlu0 %1236
      %vm1238 = vcmp.eq.s32.totalorder %v1192, 1
      %vm1239 = vcmp.eq.s32.totalorder %v1195, 1
      %vm1240 = vcmp.eq.s32.totalorder %v1198, 1
      %vm1241 = vcmp.eq.s32.totalorder %v1201, 1
      %vm1242 = vcmp.eq.s32.totalorder %v1204, 1
      %vm1243 = vcmp.eq.s32.totalorder %v1207, 1
      %vm1244 = vcmp.eq.s32.totalorder %v1210, 1
      %vm1245 = vcmp.eq.s32.totalorder %v1213, 1
      %vm1246 = vcmp.eq.s32.totalorder %v1216, 1
      %vm1247 = vcmp.eq.s32.totalorder %v1219, 1
      %vm1248 = vcmp.eq.s32.totalorder %v1222, 1
      %vm1249 = vcmp.eq.s32.totalorder %v1225, 1
      %vm1250 = vcmp.eq.s32.totalorder %v1228, 1
      %vm1251 = vcmp.eq.s32.totalorder %v1231, 1
      %vm1252 = vcmp.eq.s32.totalorder %v1234, 1
      %vm1253 = vcmp.eq.s32.totalorder %v1237, 1
      %vm1254 = vmand %vm1158, %vm1238
      %vm1255 = vmand %vm1159, %vm1239
      %vm1256 = vmand %vm1160, %vm1240
      %vm1257 = vmand %vm1161, %vm1241
      %vm1258 = vmand %vm1162, %vm1242
      %vm1259 = vmand %vm1163, %vm1243
      %vm1260 = vmand %vm1164, %vm1244
      %vm1261 = vmand %vm1165, %vm1245
      %vm1262 = vmand %vm1166, %vm1246
      %vm1263 = vmand %vm1167, %vm1247
      %vm1264 = vmand %vm1168, %vm1248
      %vm1265 = vmand %vm1169, %vm1249
      %vm1266 = vmand %vm1170, %vm1250
      %vm1267 = vmand %vm1171, %vm1251
      %vm1268 = vmand %vm1172, %vm1252
      %vm1269 = vmand %vm1173, %vm1253
      %1270 = vset.pattern.permute.xlu0 12
      %1271 = vperm.xlu0 %1270, %v270
      %v1272 = vpop.permute.xlu0 %1271
      %1274 = vset.pattern.permute.xlu0 12
      %1275 = vperm.xlu0 %1274, %v271
      %v1276 = vpop.permute.xlu0 %1275
      %1278 = vset.pattern.permute.xlu0 12
      %1279 = vperm.xlu0 %1278, %v272
      %v1280 = vpop.permute.xlu0 %1279
      %1282 = vset.pattern.permute.xlu0 12
      %1283 = vperm.xlu0 %1282, %v273
      %v1284 = vpop.permute.xlu0 %1283
      %1286 = vset.pattern.permute.xlu0 12
      %1287 = vperm.xlu0 %1286, %v274
      %v1288 = vpop.permute.xlu0 %1287
      %1290 = vset.pattern.permute.xlu0 12
      %1291 = vperm.xlu0 %1290, %v275
      %v1292 = vpop.permute.xlu0 %1291
      %1294 = vset.pattern.permute.xlu0 12
      %1295 = vperm.xlu0 %1294, %v276
      %v1296 = vpop.permute.xlu0 %1295
      %1298 = vset.pattern.permute.xlu0 12
      %1299 = vperm.xlu0 %1298, %v277
      %v1300 = vpop.permute.xlu0 %1299
      %1302 = vset.pattern.permute.xlu0 12
      %1303 = vperm.xlu0 %1302, %v278
      %v1304 = vpop.permute.xlu0 %1303
      %1306 = vset.pattern.permute.xlu0 12
      %1307 = vperm.xlu0 %1306, %v279
      %v1308 = vpop.permute.xlu0 %1307
      %1310 = vset.pattern.permute.xlu0 12
      %1311 = vperm.xlu0 %1310, %v280
      %v1312 = vpop.permute.xlu0 %1311
      %1314 = vset.pattern.permute.xlu0 12
      %1315 = vperm.xlu0 %1314, %v281
      %v1316 = vpop.permute.xlu0 %1315
      %1318 = vset.pattern.permute.xlu0 12
      %1319 = vperm.xlu0 %1318, %v282
      %v1320 = vpop.permute.xlu0 %1319
      %1322 = vset.pattern.permute.xlu0 12
      %1323 = vperm.xlu0 %1322, %v283
      %v1324 = vpop.permute.xlu0 %1323
      %1326 = vset.pattern.permute.xlu0 12
      %1327 = vperm.xlu0 %1326, %v284
      %v1328 = vpop.permute.xlu0 %1327
      %1330 = vset.pattern.permute.xlu0 12
      %1331 = vperm.xlu0 %1330, %v285
      %v1332 = vpop.permute.xlu0 %1331
      %v1334 = vmul.f32 %v566, %v1272
      %v1335 = vmul.f32 %v567, %v1276
      %v1336 = vmul.f32 %v568, %v1280
      %v1337 = vmul.f32 %v569, %v1284
      %v1338 = vmul.f32 %v570, %v1288
      %v1339 = vmul.f32 %v571, %v1292
      %v1340 = vmul.f32 %v572, %v1296
      %v1341 = vmul.f32 %v573, %v1300
      %v1342 = vmul.f32 %v574, %v1304
      %v1343 = vmul.f32 %v575, %v1308
      %v1344 = vmul.f32 %v576, %v1312
      %v1345 = vmul.f32 %v577, %v1316
      %v1346 = vmul.f32 %v578, %v1320
      %v1347 = vmul.f32 %v579, %v1324
      %v1348 = vmul.f32 %v580, %v1328
      %v1349 = vmul.f32 %v581, %v1332
      %1350 = vset.pattern.permute.xlu0 13
      %1351 = vperm.xlu0 %1350, %v270
      %v1352 = vpop.permute.xlu0 %1351
      %1354 = vset.pattern.permute.xlu0 13
      %1355 = vperm.xlu0 %1354, %v271
      %v1356 = vpop.permute.xlu0 %1355
      %1358 = vset.pattern.permute.xlu0 13
      %1359 = vperm.xlu0 %1358, %v272
      %v1360 = vpop.permute.xlu0 %1359
      %1362 = vset.pattern.permute.xlu0 13
      %1363 = vperm.xlu0 %1362, %v273
      %v1364 = vpop.permute.xlu0 %1363
      %1366 = vset.pattern.permute.xlu0 13
      %1367 = vperm.xlu0 %1366, %v274
      %v1368 = vpop.permute.xlu0 %1367
      %1370 = vset.pattern.permute.xlu0 13
      %1371 = vperm.xlu0 %1370, %v275
      %v1372 = vpop.permute.xlu0 %1371
      %1374 = vset.pattern.permute.xlu0 13
      %1375 = vperm.xlu0 %1374, %v276
      %v1376 = vpop.permute.xlu0 %1375
      %1378 = vset.pattern.permute.xlu0 13
      %1379 = vperm.xlu0 %1378, %v277
      %v1380 = vpop.permute.xlu0 %1379
      %1382 = vset.pattern.permute.xlu0 13
      %1383 = vperm.xlu0 %1382, %v278
      %v1384 = vpop.permute.xlu0 %1383
      %1386 = vset.pattern.permute.xlu0 13
      %1387 = vperm.xlu0 %1386, %v279
      %v1388 = vpop.permute.xlu0 %1387
      %1390 = vset.pattern.permute.xlu0 13
      %1391 = vperm.xlu0 %1390, %v280
      %v1392 = vpop.permute.xlu0 %1391
      %1394 = vset.pattern.permute.xlu0 13
      %1395 = vperm.xlu0 %1394, %v281
      %v1396 = vpop.permute.xlu0 %1395
      %1398 = vset.pattern.permute.xlu0 13
      %1399 = vperm.xlu0 %1398, %v282
      %v1400 = vpop.permute.xlu0 %1399
      %1402 = vset.pattern.permute.xlu0 13
      %1403 = vperm.xlu0 %1402, %v283
      %v1404 = vpop.permute.xlu0 %1403
      %1406 = vset.pattern.permute.xlu0 13
      %1407 = vperm.xlu0 %1406, %v284
      %v1408 = vpop.permute.xlu0 %1407
      %1410 = vset.pattern.permute.xlu0 13
      %1411 = vperm.xlu0 %1410, %v285
      %v1412 = vpop.permute.xlu0 %1411
      %v1414 = vmul.f32 %v822, %v1352
      %v1415 = vmul.f32 %v823, %v1356
      %v1416 = vmul.f32 %v824, %v1360
      %v1417 = vmul.f32 %v825, %v1364
      %v1418 = vmul.f32 %v826, %v1368
      %v1419 = vmul.f32 %v827, %v1372
      %v1420 = vmul.f32 %v828, %v1376
      %v1421 = vmul.f32 %v829, %v1380
      %v1422 = vmul.f32 %v830, %v1384
      %v1423 = vmul.f32 %v831, %v1388
      %v1424 = vmul.f32 %v832, %v1392
      %v1425 = vmul.f32 %v833, %v1396
      %v1426 = vmul.f32 %v834, %v1400
      %v1427 = vmul.f32 %v835, %v1404
      %v1428 = vmul.f32 %v836, %v1408
      %v1429 = vmul.f32 %v837, %v1412
      %1430 = vset.pattern.permute.xlu0 14
      %1431 = vperm.xlu0 %1430, %v270
      %v1432 = vpop.permute.xlu0 %1431
      %1434 = vset.pattern.permute.xlu0 14
      %1435 = vperm.xlu0 %1434, %v271
      %v1436 = vpop.permute.xlu0 %1435
      %1438 = vset.pattern.permute.xlu0 14
      %1439 = vperm.xlu0 %1438, %v272
      %v1440 = vpop.permute.xlu0 %1439
      %1442 = vset.pattern.permute.xlu0 14
      %1443 = vperm.xlu0 %1442, %v273
      %v1444 = vpop.permute.xlu0 %1443
      %1446 = vset.pattern.permute.xlu0 14
      %1447 = vperm.xlu0 %1446, %v274
      %v1448 = vpop.permute.xlu0 %1447
      %1450 = vset.pattern.permute.xlu0 14
      %1451 = vperm.xlu0 %1450, %v275
      %v1452 = vpop.permute.xlu0 %1451
      %1454 = vset.pattern.permute.xlu0 14
      %1455 = vperm.xlu0 %1454, %v276
      %v1456 = vpop.permute.xlu0 %1455
      %1458 = vset.pattern.permute.xlu0 14
      %1459 = vperm.xlu0 %1458, %v277
      %v1460 = vpop.permute.xlu0 %1459
      %1462 = vset.pattern.permute.xlu0 14
      %1463 = vperm.xlu0 %1462, %v278
      %v1464 = vpop.permute.xlu0 %1463
      %1466 = vset.pattern.permute.xlu0 14
      %1467 = vperm.xlu0 %1466, %v279
      %v1468 = vpop.permute.xlu0 %1467
      %1470 = vset.pattern.permute.xlu0 14
      %1471 = vperm.xlu0 %1470, %v280
      %v1472 = vpop.permute.xlu0 %1471
      %1474 = vset.pattern.permute.xlu0 14
      %1475 = vperm.xlu0 %1474, %v281
      %v1476 = vpop.permute.xlu0 %1475
      %1478 = vset.pattern.permute.xlu0 14
      %1479 = vperm.xlu0 %1478, %v282
      %v1480 = vpop.permute.xlu0 %1479
      %1482 = vset.pattern.permute.xlu0 14
      %1483 = vperm.xlu0 %1482, %v283
      %v1484 = vpop.permute.xlu0 %1483
      %1486 = vset.pattern.permute.xlu0 14
      %1487 = vperm.xlu0 %1486, %v284
      %v1488 = vpop.permute.xlu0 %1487
      %1490 = vset.pattern.permute.xlu0 14
      %1491 = vperm.xlu0 %1490, %v285
      %v1492 = vpop.permute.xlu0 %1491
      %v1494 = vmul.f32 %v1078, %v1432
      %v1495 = vmul.f32 %v1079, %v1436
      %v1496 = vmul.f32 %v1080, %v1440
      %v1497 = vmul.f32 %v1081, %v1444
      %v1498 = vmul.f32 %v1082, %v1448
      %v1499 = vmul.f32 %v1083, %v1452
      %v1500 = vmul.f32 %v1084, %v1456
      %v1501 = vmul.f32 %v1085, %v1460
      %v1502 = vmul.f32 %v1086, %v1464
      %v1503 = vmul.f32 %v1087, %v1468
      %v1504 = vmul.f32 %v1088, %v1472
      %v1505 = vmul.f32 %v1089, %v1476
      %v1506 = vmul.f32 %v1090, %v1480
      %v1507 = vmul.f32 %v1091, %v1484
      %v1508 = vmul.f32 %v1092, %v1488
      %v1509 = vmul.f32 %v1093, %v1492
      %v1510 = vadd.f32 %v1334, %v1414
      %v1511 = vadd.f32 %v1335, %v1415
      %v1512 = vadd.f32 %v1336, %v1416
      %v1513 = vadd.f32 %v1337, %v1417
      %v1514 = vadd.f32 %v1338, %v1418
      %v1515 = vadd.f32 %v1339, %v1419
      %v1516 = vadd.f32 %v1340, %v1420
      %v1517 = vadd.f32 %v1341, %v1421
      %v1518 = vadd.f32 %v1342, %v1422
      %v1519 = vadd.f32 %v1343, %v1423
      %v1520 = vadd.f32 %v1344, %v1424
      %v1521 = vadd.f32 %v1345, %v1425
      %v1522 = vadd.f32 %v1346, %v1426
      %v1523 = vadd.f32 %v1347, %v1427
      %v1524 = vadd.f32 %v1348, %v1428
      %v1525 = vadd.f32 %v1349, %v1429
      %v1526 = vadd.f32 %v1510, %v1494
      %v1527 = vadd.f32 %v1511, %v1495
      %v1528 = vadd.f32 %v1512, %v1496
      %v1529 = vadd.f32 %v1513, %v1497
      %v1530 = vadd.f32 %v1514, %v1498
      %v1531 = vadd.f32 %v1515, %v1499
      %v1532 = vadd.f32 %v1516, %v1500
      %v1533 = vadd.f32 %v1517, %v1501
      %v1534 = vadd.f32 %v1518, %v1502
      %v1535 = vadd.f32 %v1519, %v1503
      %v1536 = vadd.f32 %v1520, %v1504
      %v1537 = vadd.f32 %v1521, %v1505
      %v1538 = vadd.f32 %v1522, %v1506
      %v1539 = vadd.f32 %v1523, %v1507
      %v1540 = vadd.f32 %v1524, %v1508
      %v1541 = vadd.f32 %v1525, %v1509
      %v1542 = vmax.f32 %v1526, 1e-08
      %v1543 = vmax.f32 %v1527, 1e-08
      %v1544 = vmax.f32 %v1528, 1e-08
      %v1545 = vmax.f32 %v1529, 1e-08
      %v1546 = vmax.f32 %v1530, 1e-08
      %v1547 = vmax.f32 %v1531, 1e-08
      %v1548 = vmax.f32 %v1532, 1e-08
      %v1549 = vmax.f32 %v1533, 1e-08
      %v1550 = vmax.f32 %v1534, 1e-08
      %v1551 = vmax.f32 %v1535, 1e-08
      %v1552 = vmax.f32 %v1536, 1e-08
      %v1553 = vmax.f32 %v1537, 1e-08
      %v1554 = vmax.f32 %v1538, 1e-08
      %v1555 = vmax.f32 %v1539, 1e-08
      %v1556 = vmax.f32 %v1540, 1e-08
      %v1557 = vmax.f32 %v1541, 1e-08
      %v1558 = vrcp.pop %v1542
      %v1559 = vrcp.pop %v1543
      %v1560 = vrcp.pop %v1544
      %v1561 = vrcp.pop %v1545
      %v1562 = vrcp.pop %v1546
      %v1563 = vrcp.pop %v1547
      %v1564 = vrcp.pop %v1548
      %v1565 = vrcp.pop %v1549
      %v1566 = vrcp.pop %v1550
      %v1567 = vrcp.pop %v1551
      %v1568 = vrcp.pop %v1552
      %v1569 = vrcp.pop %v1553
      %v1570 = vrcp.pop %v1554
      %v1571 = vrcp.pop %v1555
      %v1572 = vrcp.pop %v1556
      %v1573 = vrcp.pop %v1557
      %v1574 = vmul.f32 %v1334, %v1558
      %v1575 = vmul.f32 %v1335, %v1559
      %v1576 = vmul.f32 %v1336, %v1560
      %v1577 = vmul.f32 %v1337, %v1561
      %v1578 = vmul.f32 %v1338, %v1562
      %v1579 = vmul.f32 %v1339, %v1563
      %v1580 = vmul.f32 %v1340, %v1564
      %v1581 = vmul.f32 %v1341, %v1565
      %v1582 = vmul.f32 %v1342, %v1566
      %v1583 = vmul.f32 %v1343, %v1567
      %v1584 = vmul.f32 %v1344, %v1568
      %v1585 = vmul.f32 %v1345, %v1569
      %v1586 = vmul.f32 %v1346, %v1570
      %v1587 = vmul.f32 %v1347, %v1571
      %v1588 = vmul.f32 %v1348, %v1572
      %v1589 = vmul.f32 %v1349, %v1573
      %v1590 = vsel %vm1254, %v1574, 0.0
      %v1591 = vsel %vm1255, %v1575, 0.0
      %v1592 = vsel %vm1256, %v1576, 0.0
      %v1593 = vsel %vm1257, %v1577, 0.0
      %v1594 = vsel %vm1258, %v1578, 0.0
      %v1595 = vsel %vm1259, %v1579, 0.0
      %v1596 = vsel %vm1260, %v1580, 0.0
      %v1597 = vsel %vm1261, %v1581, 0.0
      %v1598 = vsel %vm1262, %v1582, 0.0
      %v1599 = vsel %vm1263, %v1583, 0.0
      %v1600 = vsel %vm1264, %v1584, 0.0
      %v1601 = vsel %vm1265, %v1585, 0.0
      %v1602 = vsel %vm1266, %v1586, 0.0
      %v1603 = vsel %vm1267, %v1587, 0.0
      %v1604 = vsel %vm1268, %v1588, 0.0
      %v1605 = vsel %vm1269, %v1589, 0.0
      %v1606 = vmul.f32 %v1414, %v1558
      %v1607 = vmul.f32 %v1415, %v1559
      %v1608 = vmul.f32 %v1416, %v1560
      %v1609 = vmul.f32 %v1417, %v1561
      %v1610 = vmul.f32 %v1418, %v1562
      %v1611 = vmul.f32 %v1419, %v1563
      %v1612 = vmul.f32 %v1420, %v1564
      %v1613 = vmul.f32 %v1421, %v1565
      %v1614 = vmul.f32 %v1422, %v1566
      %v1615 = vmul.f32 %v1423, %v1567
      %v1616 = vmul.f32 %v1424, %v1568
      %v1617 = vmul.f32 %v1425, %v1569
      %v1618 = vmul.f32 %v1426, %v1570
      %v1619 = vmul.f32 %v1427, %v1571
      %v1620 = vmul.f32 %v1428, %v1572
      %v1621 = vmul.f32 %v1429, %v1573
      %v1622 = vsel %vm1254, %v1606, 0.0
      %v1623 = vsel %vm1255, %v1607, 0.0
      %v1624 = vsel %vm1256, %v1608, 0.0
      %v1625 = vsel %vm1257, %v1609, 0.0
      %v1626 = vsel %vm1258, %v1610, 0.0
      %v1627 = vsel %vm1259, %v1611, 0.0
      %v1628 = vsel %vm1260, %v1612, 0.0
      %v1629 = vsel %vm1261, %v1613, 0.0
      %v1630 = vsel %vm1262, %v1614, 0.0
      %v1631 = vsel %vm1263, %v1615, 0.0
      %v1632 = vsel %vm1264, %v1616, 0.0
      %v1633 = vsel %vm1265, %v1617, 0.0
      %v1634 = vsel %vm1266, %v1618, 0.0
      %v1635 = vsel %vm1267, %v1619, 0.0
      %v1636 = vsel %vm1268, %v1620, 0.0
      %v1637 = vsel %vm1269, %v1621, 0.0
      %v1638 = vmul.f32 %v1494, %v1558
      %v1639 = vmul.f32 %v1495, %v1559
      %v1640 = vmul.f32 %v1496, %v1560
      %v1641 = vmul.f32 %v1497, %v1561
      %v1642 = vmul.f32 %v1498, %v1562
      %v1643 = vmul.f32 %v1499, %v1563
      %v1644 = vmul.f32 %v1500, %v1564
      %v1645 = vmul.f32 %v1501, %v1565
      %v1646 = vmul.f32 %v1502, %v1566
      %v1647 = vmul.f32 %v1503, %v1567
      %v1648 = vmul.f32 %v1504, %v1568
      %v1649 = vmul.f32 %v1505, %v1569
      %v1650 = vmul.f32 %v1506, %v1570
      %v1651 = vmul.f32 %v1507, %v1571
      %v1652 = vmul.f32 %v1508, %v1572
      %v1653 = vmul.f32 %v1509, %v1573
      %v1654 = vsel %vm1254, %v1638, 0.0
      %v1655 = vsel %vm1255, %v1639, 0.0
      %v1656 = vsel %vm1256, %v1640, 0.0
      %v1657 = vsel %vm1257, %v1641, 0.0
      %v1658 = vsel %vm1258, %v1642, 0.0
      %v1659 = vsel %vm1259, %v1643, 0.0
      %v1660 = vsel %vm1260, %v1644, 0.0
      %v1661 = vsel %vm1261, %v1645, 0.0
      %v1662 = vsel %vm1262, %v1646, 0.0
      %v1663 = vsel %vm1263, %v1647, 0.0
      %v1664 = vsel %vm1264, %v1648, 0.0
      %v1665 = vsel %vm1265, %v1649, 0.0
      %v1666 = vsel %vm1266, %v1650, 0.0
      %v1667 = vsel %vm1267, %v1651, 0.0
      %v1668 = vsel %vm1268, %v1652, 0.0
      %v1669 = vsel %vm1269, %v1653, 0.0
      %1670 = vset.pattern.permute.xlu0 9
      %1671 = vperm.xlu0 %1670, %v270
      %v1672 = vpop.permute.xlu0 %1671
      %1674 = vset.pattern.permute.xlu0 9
      %1675 = vperm.xlu0 %1674, %v271
      %v1676 = vpop.permute.xlu0 %1675
      %1678 = vset.pattern.permute.xlu0 9
      %1679 = vperm.xlu0 %1678, %v272
      %v1680 = vpop.permute.xlu0 %1679
      %1682 = vset.pattern.permute.xlu0 9
      %1683 = vperm.xlu0 %1682, %v273
      %v1684 = vpop.permute.xlu0 %1683
      %1686 = vset.pattern.permute.xlu0 9
      %1687 = vperm.xlu0 %1686, %v274
      %v1688 = vpop.permute.xlu0 %1687
      %1690 = vset.pattern.permute.xlu0 9
      %1691 = vperm.xlu0 %1690, %v275
      %v1692 = vpop.permute.xlu0 %1691
      %1694 = vset.pattern.permute.xlu0 9
      %1695 = vperm.xlu0 %1694, %v276
      %v1696 = vpop.permute.xlu0 %1695
      %1698 = vset.pattern.permute.xlu0 9
      %1699 = vperm.xlu0 %1698, %v277
      %v1700 = vpop.permute.xlu0 %1699
      %1702 = vset.pattern.permute.xlu0 9
      %1703 = vperm.xlu0 %1702, %v278
      %v1704 = vpop.permute.xlu0 %1703
      %1706 = vset.pattern.permute.xlu0 9
      %1707 = vperm.xlu0 %1706, %v279
      %v1708 = vpop.permute.xlu0 %1707
      %1710 = vset.pattern.permute.xlu0 9
      %1711 = vperm.xlu0 %1710, %v280
      %v1712 = vpop.permute.xlu0 %1711
      %1714 = vset.pattern.permute.xlu0 9
      %1715 = vperm.xlu0 %1714, %v281
      %v1716 = vpop.permute.xlu0 %1715
      %1718 = vset.pattern.permute.xlu0 9
      %1719 = vperm.xlu0 %1718, %v282
      %v1720 = vpop.permute.xlu0 %1719
      %1722 = vset.pattern.permute.xlu0 9
      %1723 = vperm.xlu0 %1722, %v283
      %v1724 = vpop.permute.xlu0 %1723
      %1726 = vset.pattern.permute.xlu0 9
      %1727 = vperm.xlu0 %1726, %v284
      %v1728 = vpop.permute.xlu0 %1727
      %1730 = vset.pattern.permute.xlu0 9
      %1731 = vperm.xlu0 %1730, %v285
      %v1732 = vpop.permute.xlu0 %1731
      %v1734 = vmul.f32 %v1590, %v1672
      %v1735 = vmul.f32 %v1591, %v1676
      %v1736 = vmul.f32 %v1592, %v1680
      %v1737 = vmul.f32 %v1593, %v1684
      %v1738 = vmul.f32 %v1594, %v1688
      %v1739 = vmul.f32 %v1595, %v1692
      %v1740 = vmul.f32 %v1596, %v1696
      %v1741 = vmul.f32 %v1597, %v1700
      %v1742 = vmul.f32 %v1598, %v1704
      %v1743 = vmul.f32 %v1599, %v1708
      %v1744 = vmul.f32 %v1600, %v1712
      %v1745 = vmul.f32 %v1601, %v1716
      %v1746 = vmul.f32 %v1602, %v1720
      %v1747 = vmul.f32 %v1603, %v1724
      %v1748 = vmul.f32 %v1604, %v1728
      %v1749 = vmul.f32 %v1605, %v1732
      %1750 = vset.pattern.permute.xlu0 10
      %1751 = vperm.xlu0 %1750, %v270
      %v1752 = vpop.permute.xlu0 %1751
      %1754 = vset.pattern.permute.xlu0 10
      %1755 = vperm.xlu0 %1754, %v271
      %v1756 = vpop.permute.xlu0 %1755
      %1758 = vset.pattern.permute.xlu0 10
      %1759 = vperm.xlu0 %1758, %v272
      %v1760 = vpop.permute.xlu0 %1759
      %1762 = vset.pattern.permute.xlu0 10
      %1763 = vperm.xlu0 %1762, %v273
      %v1764 = vpop.permute.xlu0 %1763
      %1766 = vset.pattern.permute.xlu0 10
      %1767 = vperm.xlu0 %1766, %v274
      %v1768 = vpop.permute.xlu0 %1767
      %1770 = vset.pattern.permute.xlu0 10
      %1771 = vperm.xlu0 %1770, %v275
      %v1772 = vpop.permute.xlu0 %1771
      %1774 = vset.pattern.permute.xlu0 10
      %1775 = vperm.xlu0 %1774, %v276
      %v1776 = vpop.permute.xlu0 %1775
      %1778 = vset.pattern.permute.xlu0 10
      %1779 = vperm.xlu0 %1778, %v277
      %v1780 = vpop.permute.xlu0 %1779
      %1782 = vset.pattern.permute.xlu0 10
      %1783 = vperm.xlu0 %1782, %v278
      %v1784 = vpop.permute.xlu0 %1783
      %1786 = vset.pattern.permute.xlu0 10
      %1787 = vperm.xlu0 %1786, %v279
      %v1788 = vpop.permute.xlu0 %1787
      %1790 = vset.pattern.permute.xlu0 10
      %1791 = vperm.xlu0 %1790, %v280
      %v1792 = vpop.permute.xlu0 %1791
      %1794 = vset.pattern.permute.xlu0 10
      %1795 = vperm.xlu0 %1794, %v281
      %v1796 = vpop.permute.xlu0 %1795
      %1798 = vset.pattern.permute.xlu0 10
      %1799 = vperm.xlu0 %1798, %v282
      %v1800 = vpop.permute.xlu0 %1799
      %1802 = vset.pattern.permute.xlu0 10
      %1803 = vperm.xlu0 %1802, %v283
      %v1804 = vpop.permute.xlu0 %1803
      %1806 = vset.pattern.permute.xlu0 10
      %1807 = vperm.xlu0 %1806, %v284
      %v1808 = vpop.permute.xlu0 %1807
      %1810 = vset.pattern.permute.xlu0 10
      %1811 = vperm.xlu0 %1810, %v285
      %v1812 = vpop.permute.xlu0 %1811
      %v1814 = vmul.f32 %v1622, %v1752
      %v1815 = vmul.f32 %v1623, %v1756
      %v1816 = vmul.f32 %v1624, %v1760
      %v1817 = vmul.f32 %v1625, %v1764
      %v1818 = vmul.f32 %v1626, %v1768
      %v1819 = vmul.f32 %v1627, %v1772
      %v1820 = vmul.f32 %v1628, %v1776
      %v1821 = vmul.f32 %v1629, %v1780
      %v1822 = vmul.f32 %v1630, %v1784
      %v1823 = vmul.f32 %v1631, %v1788
      %v1824 = vmul.f32 %v1632, %v1792
      %v1825 = vmul.f32 %v1633, %v1796
      %v1826 = vmul.f32 %v1634, %v1800
      %v1827 = vmul.f32 %v1635, %v1804
      %v1828 = vmul.f32 %v1636, %v1808
      %v1829 = vmul.f32 %v1637, %v1812
      %v1830 = vadd.f32 %v1734, %v1814
      %v1831 = vadd.f32 %v1735, %v1815
      %v1832 = vadd.f32 %v1736, %v1816
      %v1833 = vadd.f32 %v1737, %v1817
      %v1834 = vadd.f32 %v1738, %v1818
      %v1835 = vadd.f32 %v1739, %v1819
      %v1836 = vadd.f32 %v1740, %v1820
      %v1837 = vadd.f32 %v1741, %v1821
      %v1838 = vadd.f32 %v1742, %v1822
      %v1839 = vadd.f32 %v1743, %v1823
      %v1840 = vadd.f32 %v1744, %v1824
      %v1841 = vadd.f32 %v1745, %v1825
      %v1842 = vadd.f32 %v1746, %v1826
      %v1843 = vadd.f32 %v1747, %v1827
      %v1844 = vadd.f32 %v1748, %v1828
      %v1845 = vadd.f32 %v1749, %v1829
      %1846 = vset.pattern.permute.xlu0 11
      %1847 = vperm.xlu0 %1846, %v270
      %v1848 = vpop.permute.xlu0 %1847
      %1850 = vset.pattern.permute.xlu0 11
      %1851 = vperm.xlu0 %1850, %v271
      %v1852 = vpop.permute.xlu0 %1851
      %1854 = vset.pattern.permute.xlu0 11
      %1855 = vperm.xlu0 %1854, %v272
      %v1856 = vpop.permute.xlu0 %1855
      %1858 = vset.pattern.permute.xlu0 11
      %1859 = vperm.xlu0 %1858, %v273
      %v1860 = vpop.permute.xlu0 %1859
      %1862 = vset.pattern.permute.xlu0 11
      %1863 = vperm.xlu0 %1862, %v274
      %v1864 = vpop.permute.xlu0 %1863
      %1866 = vset.pattern.permute.xlu0 11
      %1867 = vperm.xlu0 %1866, %v275
      %v1868 = vpop.permute.xlu0 %1867
      %1870 = vset.pattern.permute.xlu0 11
      %1871 = vperm.xlu0 %1870, %v276
      %v1872 = vpop.permute.xlu0 %1871
      %1874 = vset.pattern.permute.xlu0 11
      %1875 = vperm.xlu0 %1874, %v277
      %v1876 = vpop.permute.xlu0 %1875
      %1878 = vset.pattern.permute.xlu0 11
      %1879 = vperm.xlu0 %1878, %v278
      %v1880 = vpop.permute.xlu0 %1879
      %1882 = vset.pattern.permute.xlu0 11
      %1883 = vperm.xlu0 %1882, %v279
      %v1884 = vpop.permute.xlu0 %1883
      %1886 = vset.pattern.permute.xlu0 11
      %1887 = vperm.xlu0 %1886, %v280
      %v1888 = vpop.permute.xlu0 %1887
      %1890 = vset.pattern.permute.xlu0 11
      %1891 = vperm.xlu0 %1890, %v281
      %v1892 = vpop.permute.xlu0 %1891
      %1894 = vset.pattern.permute.xlu0 11
      %1895 = vperm.xlu0 %1894, %v282
      %v1896 = vpop.permute.xlu0 %1895
      %1898 = vset.pattern.permute.xlu0 11
      %1899 = vperm.xlu0 %1898, %v283
      %v1900 = vpop.permute.xlu0 %1899
      %1902 = vset.pattern.permute.xlu0 11
      %1903 = vperm.xlu0 %1902, %v284
      %v1904 = vpop.permute.xlu0 %1903
      %1906 = vset.pattern.permute.xlu0 11
      %1907 = vperm.xlu0 %1906, %v285
      %v1908 = vpop.permute.xlu0 %1907
      %v1910 = vmul.f32 %v1654, %v1848
      %v1911 = vmul.f32 %v1655, %v1852
      %v1912 = vmul.f32 %v1656, %v1856
      %v1913 = vmul.f32 %v1657, %v1860
      %v1914 = vmul.f32 %v1658, %v1864
      %v1915 = vmul.f32 %v1659, %v1868
      %v1916 = vmul.f32 %v1660, %v1872
      %v1917 = vmul.f32 %v1661, %v1876
      %v1918 = vmul.f32 %v1662, %v1880
      %v1919 = vmul.f32 %v1663, %v1884
      %v1920 = vmul.f32 %v1664, %v1888
      %v1921 = vmul.f32 %v1665, %v1892
      %v1922 = vmul.f32 %v1666, %v1896
      %v1923 = vmul.f32 %v1667, %v1900
      %v1924 = vmul.f32 %v1668, %v1904
      %v1925 = vmul.f32 %v1669, %v1908
      %v1926 = vadd.f32 %v1830, %v1910
      %v1927 = vadd.f32 %v1831, %v1911
      %v1928 = vadd.f32 %v1832, %v1912
      %v1929 = vadd.f32 %v1833, %v1913
      %v1930 = vadd.f32 %v1834, %v1914
      %v1931 = vadd.f32 %v1835, %v1915
      %v1932 = vadd.f32 %v1836, %v1916
      %v1933 = vadd.f32 %v1837, %v1917
      %v1934 = vadd.f32 %v1838, %v1918
      %v1935 = vadd.f32 %v1839, %v1919
      %v1936 = vadd.f32 %v1840, %v1920
      %v1937 = vadd.f32 %v1841, %v1921
      %v1938 = vadd.f32 %v1842, %v1922
      %v1939 = vadd.f32 %v1843, %v1923
      %v1940 = vadd.f32 %v1844, %v1924
      %v1941 = vadd.f32 %v1845, %v1925
      %v1942 = vsel %vm1254, %v1926, inf
      %v1943 = vsel %vm1255, %v1927, inf
      %v1944 = vsel %vm1256, %v1928, inf
      %v1945 = vsel %vm1257, %v1929, inf
      %v1946 = vsel %vm1258, %v1930, inf
      %v1947 = vsel %vm1259, %v1931, inf
      %v1948 = vsel %vm1260, %v1932, inf
      %v1949 = vsel %vm1261, %v1933, inf
      %v1950 = vsel %vm1262, %v1934, inf
      %v1951 = vsel %vm1263, %v1935, inf
      %v1952 = vsel %vm1264, %v1936, inf
      %v1953 = vsel %vm1265, %v1937, inf
      %v1954 = vsel %vm1266, %v1938, inf
      %v1955 = vsel %vm1267, %v1939, inf
      %v1956 = vsel %vm1268, %v1940, inf
      %v1957 = vsel %vm1269, %v1941, inf
      %v1958 = vmin.f32 %v1942, %v1946
      %v1959 = vmin.f32 %v1943, %v1947
      %v1960 = vmin.f32 %v1944, %v1948
      %v1961 = vmin.f32 %v1945, %v1949
      %v1962 = vmin.f32 %v1958, %v1950
      %v1963 = vmin.f32 %v1959, %v1951
      %v1964 = vmin.f32 %v1960, %v1952
      %v1965 = vmin.f32 %v1961, %v1953
      %v1966 = vmin.f32 %v1962, %v1954
      %v1967 = vmin.f32 %v1963, %v1955
      %v1968 = vmin.f32 %v1964, %v1956
      %v1969 = vmin.f32 %v1965, %v1957
      %v1970 = vmin.f32 %v1966, %v1967
      %v1971 = vmin.f32 %v1968, %v1969
      %v1972 = vmin.f32 %v1970, %v1971
      %v1973 = vrot.slane %v1972, 4
      %v1974 = vmin.f32 %v1972, %v1973
      %v1975 = vrot.slane %v1974, 2
      %v1976 = vmin.f32 %v1974, %v1975
      %v1977 = vrot.slane %v1976, 1
      %v1978 = vmin.f32 %v1976, %v1977
      %v1979 = vlaneseq
      %v1980 = vshrl.u32 %v1979, 7
      %v1981 = vadd.s32 %v1980, 8
      %v1982 = vadd.s32 %v1980, 16
      %v1983 = vadd.s32 %v1980, 24
      %v1984 = vadd.s32 %v1980, 32
      %v1985 = vadd.s32 %v1980, 40
      %v1986 = vadd.s32 %v1980, 48
      %v1987 = vadd.s32 %v1980, 56
      %v1988 = vadd.s32 %v1980, 64
      %v1989 = vadd.s32 %v1980, 72
      %v1990 = vadd.s32 %v1980, 80
      %v1991 = vadd.s32 %v1980, 88
      %v1992 = vadd.s32 %v1980, 96
      %v1993 = vadd.s32 %v1980, 104
      %v1994 = vadd.s32 %v1980, 112
      %v1995 = vadd.s32 %v1980, 120
      %vm1996 = vcmp.eq.f32.partialorder %v1942, %v1978
      %vm1997 = vcmp.eq.f32.partialorder %v1943, %v1978
      %vm1998 = vcmp.eq.f32.partialorder %v1944, %v1978
      %vm1999 = vcmp.eq.f32.partialorder %v1945, %v1978
      %vm2000 = vcmp.eq.f32.partialorder %v1946, %v1978
      %vm2001 = vcmp.eq.f32.partialorder %v1947, %v1978
      %vm2002 = vcmp.eq.f32.partialorder %v1948, %v1978
      %vm2003 = vcmp.eq.f32.partialorder %v1949, %v1978
      %vm2004 = vcmp.eq.f32.partialorder %v1950, %v1978
      %vm2005 = vcmp.eq.f32.partialorder %v1951, %v1978
      %vm2006 = vcmp.eq.f32.partialorder %v1952, %v1978
      %vm2007 = vcmp.eq.f32.partialorder %v1953, %v1978
      %vm2008 = vcmp.eq.f32.partialorder %v1954, %v1978
      %vm2009 = vcmp.eq.f32.partialorder %v1955, %v1978
      %vm2010 = vcmp.eq.f32.partialorder %v1956, %v1978
      %vm2011 = vcmp.eq.f32.partialorder %v1957, %v1978
      %vm2012 = vmand %vm1254, %vm1996
      %vm2013 = vmand %vm1255, %vm1997
      %vm2014 = vmand %vm1256, %vm1998
      %vm2015 = vmand %vm1257, %vm1999
      %vm2016 = vmand %vm1258, %vm2000
      %vm2017 = vmand %vm1259, %vm2001
      %vm2018 = vmand %vm1260, %vm2002
      %vm2019 = vmand %vm1261, %vm2003
      %vm2020 = vmand %vm1262, %vm2004
      %vm2021 = vmand %vm1263, %vm2005
      %vm2022 = vmand %vm1264, %vm2006
      %vm2023 = vmand %vm1265, %vm2007
      %vm2024 = vmand %vm1266, %vm2008
      %vm2025 = vmand %vm1267, %vm2009
      %vm2026 = vmand %vm1268, %vm2010
      %vm2027 = vmand %vm1269, %vm2011
      %v2028 = vsel %vm2012, %v1980, 128
      %v2029 = vsel %vm2013, %v1981, 128
      %v2030 = vsel %vm2014, %v1982, 128
      %v2031 = vsel %vm2015, %v1983, 128
      %v2032 = vsel %vm2016, %v1984, 128
      %v2033 = vsel %vm2017, %v1985, 128
      %v2034 = vsel %vm2018, %v1986, 128
      %v2035 = vsel %vm2019, %v1987, 128
      %v2036 = vsel %vm2020, %v1988, 128
      %v2037 = vsel %vm2021, %v1989, 128
      %v2038 = vsel %vm2022, %v1990, 128
      %v2039 = vsel %vm2023, %v1991, 128
      %v2040 = vsel %vm2024, %v1992, 128
      %v2041 = vsel %vm2025, %v1993, 128
      %v2042 = vsel %vm2026, %v1994, 128
      %v2043 = vsel %vm2027, %v1995, 128
      %vm2044 = vcmp.lt.s32.totalorder %v2028, %v2032
      %v2045 = vsel %vm2044, %v2028, %v2032
      %vm2046 = vcmp.lt.s32.totalorder %v2029, %v2033
      %v2047 = vsel %vm2046, %v2029, %v2033
      %vm2048 = vcmp.lt.s32.totalorder %v2030, %v2034
      %v2049 = vsel %vm2048, %v2030, %v2034
      %vm2050 = vcmp.lt.s32.totalorder %v2031, %v2035
      %v2051 = vsel %vm2050, %v2031, %v2035
      %vm2052 = vcmp.lt.s32.totalorder %v2045, %v2036
      %v2053 = vsel %vm2052, %v2045, %v2036
      %vm2054 = vcmp.lt.s32.totalorder %v2047, %v2037
      %v2055 = vsel %vm2054, %v2047, %v2037
      %vm2056 = vcmp.lt.s32.totalorder %v2049, %v2038
      %v2057 = vsel %vm2056, %v2049, %v2038
      %vm2058 = vcmp.lt.s32.totalorder %v2051, %v2039
      %v2059 = vsel %vm2058, %v2051, %v2039
      %vm2060 = vcmp.lt.s32.totalorder %v2053, %v2040
      %v2061 = vsel %vm2060, %v2053, %v2040
      %vm2062 = vcmp.lt.s32.totalorder %v2055, %v2041
      %v2063 = vsel %vm2062, %v2055, %v2041
      %vm2064 = vcmp.lt.s32.totalorder %v2057, %v2042
      %v2065 = vsel %vm2064, %v2057, %v2042
      %vm2066 = vcmp.lt.s32.totalorder %v2059, %v2043
      %v2067 = vsel %vm2066, %v2059, %v2043
      %vm2068 = vcmp.lt.s32.totalorder %v2061, %v2063
      %v2069 = vsel %vm2068, %v2061, %v2063
      %vm2070 = vcmp.lt.s32.totalorder %v2065, %v2067
      %v2071 = vsel %vm2070, %v2065, %v2067
      %vm2072 = vcmp.lt.s32.totalorder %v2069, %v2071
      %v2073 = vsel %vm2072, %v2069, %v2071
      %v2074 = vrot.slane %v2073, 4
      %vm2075 = vcmp.lt.s32.totalorder %v2073, %v2074
      %v2076 = vsel %vm2075, %v2073, %v2074
      %v2077 = vrot.slane %v2076, 2
      %vm2078 = vcmp.lt.s32.totalorder %v2076, %v2077
      %v2079 = vsel %vm2078, %v2076, %v2077
      %v2080 = vrot.slane %v2079, 1
      %vm2081 = vcmp.lt.s32.totalorder %v2079, %v2080
      %v2082 = vsel %vm2081, %v2079, %v2080
      %vm2083 = vcmp.eq.s32.totalorder %v1980, %v2082
      %vm2084 = vcmp.eq.s32.totalorder %v1981, %v2082
      %vm2085 = vcmp.eq.s32.totalorder %v1982, %v2082
      %vm2086 = vcmp.eq.s32.totalorder %v1983, %v2082
      %vm2087 = vcmp.eq.s32.totalorder %v1984, %v2082
      %vm2088 = vcmp.eq.s32.totalorder %v1985, %v2082
      %vm2089 = vcmp.eq.s32.totalorder %v1986, %v2082
      %vm2090 = vcmp.eq.s32.totalorder %v1987, %v2082
      %vm2091 = vcmp.eq.s32.totalorder %v1988, %v2082
      %vm2092 = vcmp.eq.s32.totalorder %v1989, %v2082
      %vm2093 = vcmp.eq.s32.totalorder %v1990, %v2082
      %vm2094 = vcmp.eq.s32.totalorder %v1991, %v2082
      %vm2095 = vcmp.eq.s32.totalorder %v1992, %v2082
      %vm2096 = vcmp.eq.s32.totalorder %v1993, %v2082
      %vm2097 = vcmp.eq.s32.totalorder %v1994, %v2082
      %vm2098 = vcmp.eq.s32.totalorder %v1995, %v2082
      %v2099 = vld [vmem:[%s253] sm:$0x1f]
      %v2100 = vsel %vm2083, %v1590, 0.0
      %v2101 = vsel %vm2084, %v1591, 0.0
      %v2102 = vsel %vm2085, %v1592, 0.0
      %v2103 = vsel %vm2086, %v1593, 0.0
      %v2104 = vsel %vm2087, %v1594, 0.0
      %v2105 = vsel %vm2088, %v1595, 0.0
      %v2106 = vsel %vm2089, %v1596, 0.0
      %v2107 = vsel %vm2090, %v1597, 0.0
      %v2108 = vsel %vm2091, %v1598, 0.0
      %v2109 = vsel %vm2092, %v1599, 0.0
      %v2110 = vsel %vm2093, %v1600, 0.0
      %v2111 = vsel %vm2094, %v1601, 0.0
      %v2112 = vsel %vm2095, %v1602, 0.0
      %v2113 = vsel %vm2096, %v1603, 0.0
      %v2114 = vsel %vm2097, %v1604, 0.0
      %v2115 = vsel %vm2098, %v1605, 0.0
      %s2116 = scalar_lea.vmem %s253, 8
      %v2117 = vld [vmem:[%s2116] sm:$0x1f]
      %v2118 = vsel %vm2083, %v1622, 0.0
      %v2119 = vsel %vm2084, %v1623, 0.0
      %v2120 = vsel %vm2085, %v1624, 0.0
      %v2121 = vsel %vm2086, %v1625, 0.0
      %v2122 = vsel %vm2087, %v1626, 0.0
      %v2123 = vsel %vm2088, %v1627, 0.0
      %v2124 = vsel %vm2089, %v1628, 0.0
      %v2125 = vsel %vm2090, %v1629, 0.0
      %v2126 = vsel %vm2091, %v1630, 0.0
      %v2127 = vsel %vm2092, %v1631, 0.0
      %v2128 = vsel %vm2093, %v1632, 0.0
      %v2129 = vsel %vm2094, %v1633, 0.0
      %v2130 = vsel %vm2095, %v1634, 0.0
      %v2131 = vsel %vm2096, %v1635, 0.0
      %v2132 = vsel %vm2097, %v1636, 0.0
      %v2133 = vsel %vm2098, %v1637, 0.0
      %2134 = vmatprep.subr.mxu0 0.0
      %2135 = vmatpush1.msra.mxu0 %v2133
      %2136 = vmatprep.subr.mxu0 0.0
      %2137 = vmatpush1.msra.mxu0 %v2132
      %2138 = vmatprep.subr.mxu0 0.0
      %2139 = vmatpush1.msra.mxu0 %v2131
      %2140 = vmatprep.subr.mxu0 0.0
      %2141 = vmatpush1.msra.mxu0 %v2130
      %2142 = vmatprep.subr.mxu0 0.0
      %2143 = vmatpush1.msra.mxu0 %v2129
      %2144 = vmatprep.subr.mxu0 0.0
      %2145 = vmatpush1.msra.mxu0 %v2128
      %2146 = vmatprep.subr.mxu0 0.0
      %2147 = vmatpush1.msra.mxu0 %v2127
      %2148 = vmatprep.subr.mxu0 0.0
      %2149 = vmatpush1.msra.mxu0 %v2126
      %2150 = vmatprep.subr.mxu0 0.0
      %2151 = vmatpush1.msra.mxu0 %v2125
      %2152 = vmatprep.subr.mxu0 0.0
      %2153 = vmatpush1.msra.mxu0 %v2124
      %2154 = vmatprep.subr.mxu0 0.0
      %2155 = vmatpush1.msra.mxu0 %v2123
      %2156 = vmatprep.subr.mxu0 0.0
      %2157 = vmatpush1.msra.mxu0 %v2122
      %2158 = vmatprep.subr.mxu0 0.0
      %2159 = vmatpush1.msra.mxu0 %v2121
      %2160 = vmatprep.subr.mxu0 0.0
      %2161 = vmatpush1.msra.mxu0 %v2120
      %2162 = vmatprep.subr.mxu0 0.0
      %2163 = vmatpush1.msra.mxu0 %v2119
      %2164 = vmatprep.subr.mxu0 0.0
      %2165 = vmatpush1.msra.mxu0 %v2118
      %2166 = vmatprep.subr.mxu0 0.0
      %2167 = vmatpush2.msra.mxu0 0.0
      %2168 = vmatprep.subr.mxu0 0.0
      %2169 = vmatpush2.msra.mxu0 0.0
      %2170 = vmatprep.subr.mxu0 0.0
      %2171 = vmatpush2.msra.mxu0 0.0
      %2172 = vmatprep.subr.mxu0 0.0
      %2173 = vmatpush2.msra.mxu0 0.0
      %2174 = vmatprep.subr.mxu0 0.0
      %2175 = vmatpush2.msra.mxu0 0.0
      %2176 = vmatprep.subr.mxu0 0.0
      %2177 = vmatpush2.msra.mxu0 0.0
      %2178 = vmatprep.subr.mxu0 0.0
      %2179 = vmatpush2.msra.mxu0 0.0
      %2180 = vmatprep.subr.mxu0 0.0
      %2181 = vmatpush2.msra.mxu0 0.0
      %2182 = vmatprep.subr.mxu0 0.0
      %2183 = vmatpush2.msra.mxu0 0.0
      %2184 = vmatprep.subr.mxu0 0.0
      %2185 = vmatpush2.msra.mxu0 0.0
      %2186 = vmatprep.subr.mxu0 0.0
      %2187 = vmatpush2.msra.mxu0 0.0
      %2188 = vmatprep.subr.mxu0 0.0
      %2189 = vmatpush2.msra.mxu0 0.0
      %2190 = vmatprep.subr.mxu0 0.0
      %2191 = vmatpush2.msra.mxu0 0.0
      %2192 = vmatprep.subr.mxu0 0.0
      %2193 = vmatpush2.msra.mxu0 0.0
      %2194 = vmatprep.subr.mxu0 0.0
      %2195 = vmatpush2.msra.mxu0 0.0
      %2196 = vmatprep.subr.mxu0 0.0
      %2197 = vmatpush2.msra.mxu0 0.0
      %2198 = vmatprep.mubr.f32.mxu0 0.0
      %2199 = vmatmul.mubr.f32.gmra.mxu0 %v2117
      %v2200 = vpop.f32.mrf.mxu0
      %v2201 = vadd.f32 0.0, %v2200
      %v2202 = vpop.f32.mrf.mxu0
      %2203 = vdwg.mxu0
      %2204 = vmatprep.subr.mxu0 0.0
      %2205 = vmatpush1.msra.mxu0 %v2115
      %2206 = vmatprep.subr.mxu0 0.0
      %2207 = vmatpush1.msra.mxu0 %v2114
      %2208 = vmatprep.subr.mxu0 0.0
      %2209 = vmatpush1.msra.mxu0 %v2113
      %2210 = vmatprep.subr.mxu0 0.0
      %2211 = vmatpush1.msra.mxu0 %v2112
      %2212 = vmatprep.subr.mxu0 0.0
      %2213 = vmatpush1.msra.mxu0 %v2111
      %2214 = vmatprep.subr.mxu0 0.0
      %2215 = vmatpush1.msra.mxu0 %v2110
      %2216 = vmatprep.subr.mxu0 0.0
      %2217 = vmatpush1.msra.mxu0 %v2109
      %2218 = vmatprep.subr.mxu0 0.0
      %2219 = vmatpush1.msra.mxu0 %v2108
      %2220 = vmatprep.subr.mxu0 0.0
      %2221 = vmatpush1.msra.mxu0 %v2107
      %2222 = vmatprep.subr.mxu0 0.0
      %2223 = vmatpush1.msra.mxu0 %v2106
      %2224 = vmatprep.subr.mxu0 0.0
      %2225 = vmatpush1.msra.mxu0 %v2105
      %2226 = vmatprep.subr.mxu0 0.0
      %2227 = vmatpush1.msra.mxu0 %v2104
      %2228 = vmatprep.subr.mxu0 0.0
      %2229 = vmatpush1.msra.mxu0 %v2103
      %2230 = vmatprep.subr.mxu0 0.0
      %2231 = vmatpush1.msra.mxu0 %v2102
      %2232 = vmatprep.subr.mxu0 0.0
      %2233 = vmatpush1.msra.mxu0 %v2101
      %2234 = vmatprep.subr.mxu0 0.0
      %2235 = vmatpush1.msra.mxu0 %v2100
      %2236 = vmatprep.subr.mxu0 0.0
      %2237 = vmatpush2.msra.mxu0 0.0
      %2238 = vmatprep.subr.mxu0 0.0
      %2239 = vmatpush2.msra.mxu0 0.0
      %2240 = vmatprep.subr.mxu0 0.0
      %2241 = vmatpush2.msra.mxu0 0.0
      %2242 = vmatprep.subr.mxu0 0.0
      %2243 = vmatpush2.msra.mxu0 0.0
      %2244 = vmatprep.subr.mxu0 0.0
      %2245 = vmatpush2.msra.mxu0 0.0
      %2246 = vmatprep.subr.mxu0 0.0
      %2247 = vmatpush2.msra.mxu0 0.0
      %2248 = vmatprep.subr.mxu0 0.0
      %2249 = vmatpush2.msra.mxu0 0.0
      %2250 = vmatprep.subr.mxu0 0.0
      %2251 = vmatpush2.msra.mxu0 0.0
      %2252 = vmatprep.subr.mxu0 0.0
      %2253 = vmatpush2.msra.mxu0 0.0
      %2254 = vmatprep.subr.mxu0 0.0
      %2255 = vmatpush2.msra.mxu0 0.0
      %2256 = vmatprep.subr.mxu0 0.0
      %2257 = vmatpush2.msra.mxu0 0.0
      %2258 = vmatprep.subr.mxu0 0.0
      %2259 = vmatpush2.msra.mxu0 0.0
      %2260 = vmatprep.subr.mxu0 0.0
      %2261 = vmatpush2.msra.mxu0 0.0
      %2262 = vmatprep.subr.mxu0 0.0
      %2263 = vmatpush2.msra.mxu0 0.0
      %2264 = vmatprep.subr.mxu0 0.0
      %2265 = vmatpush2.msra.mxu0 0.0
      %2266 = vmatprep.subr.mxu0 0.0
      %2267 = vmatpush2.msra.mxu0 0.0
      %2268 = vmatprep.mubr.f32.mxu0 0.0
      %2269 = vmatmul.mubr.f32.gmra.mxu0 %v2099
      %v2270 = vpop.f32.mrf.mxu0
      %v2271 = vadd.f32 %v2201, %v2270
      %v2272 = vpop.f32.mrf.mxu0
      %2273 = vdwg.mxu0
      %s2274 = scalar_lea.vmem %s253, 16
      %v2275 = vld [vmem:[%s2274] sm:$0x1f]
      %v2276 = vsel %vm2083, %v1654, 0.0
      %v2277 = vsel %vm2084, %v1655, 0.0
      %v2278 = vsel %vm2085, %v1656, 0.0
      %v2279 = vsel %vm2086, %v1657, 0.0
      %v2280 = vsel %vm2087, %v1658, 0.0
      %v2281 = vsel %vm2088, %v1659, 0.0
      %v2282 = vsel %vm2089, %v1660, 0.0
      %v2283 = vsel %vm2090, %v1661, 0.0
      %v2284 = vsel %vm2091, %v1662, 0.0
      %v2285 = vsel %vm2092, %v1663, 0.0
      %v2286 = vsel %vm2093, %v1664, 0.0
      %v2287 = vsel %vm2094, %v1665, 0.0
      %v2288 = vsel %vm2095, %v1666, 0.0
      %v2289 = vsel %vm2096, %v1667, 0.0
      %v2290 = vsel %vm2097, %v1668, 0.0
      %v2291 = vsel %vm2098, %v1669, 0.0
      %2292 = vmatprep.subr.mxu0 0.0
      %2293 = vmatpush1.msra.mxu0 %v2291
      %2294 = vmatprep.subr.mxu0 0.0
      %2295 = vmatpush1.msra.mxu0 %v2290
      %2296 = vmatprep.subr.mxu0 0.0
      %2297 = vmatpush1.msra.mxu0 %v2289
      %2298 = vmatprep.subr.mxu0 0.0
      %2299 = vmatpush1.msra.mxu0 %v2288
      %2300 = vmatprep.subr.mxu0 0.0
      %2301 = vmatpush1.msra.mxu0 %v2287
      %2302 = vmatprep.subr.mxu0 0.0
      %2303 = vmatpush1.msra.mxu0 %v2286
      %2304 = vmatprep.subr.mxu0 0.0
      %2305 = vmatpush1.msra.mxu0 %v2285
      %2306 = vmatprep.subr.mxu0 0.0
      %2307 = vmatpush1.msra.mxu0 %v2284
      %2308 = vmatprep.subr.mxu0 0.0
      %2309 = vmatpush1.msra.mxu0 %v2283
      %2310 = vmatprep.subr.mxu0 0.0
      %2311 = vmatpush1.msra.mxu0 %v2282
      %2312 = vmatprep.subr.mxu0 0.0
      %2313 = vmatpush1.msra.mxu0 %v2281
      %2314 = vmatprep.subr.mxu0 0.0
      %2315 = vmatpush1.msra.mxu0 %v2280
      %2316 = vmatprep.subr.mxu0 0.0
      %2317 = vmatpush1.msra.mxu0 %v2279
      %2318 = vmatprep.subr.mxu0 0.0
      %2319 = vmatpush1.msra.mxu0 %v2278
      %2320 = vmatprep.subr.mxu0 0.0
      %2321 = vmatpush1.msra.mxu0 %v2277
      %2322 = vmatprep.subr.mxu0 0.0
      %2323 = vmatpush1.msra.mxu0 %v2276
      %2324 = vmatprep.subr.mxu0 0.0
      %2325 = vmatpush2.msra.mxu0 0.0
      %2326 = vmatprep.subr.mxu0 0.0
      %2327 = vmatpush2.msra.mxu0 0.0
      %2328 = vmatprep.subr.mxu0 0.0
      %2329 = vmatpush2.msra.mxu0 0.0
      %2330 = vmatprep.subr.mxu0 0.0
      %2331 = vmatpush2.msra.mxu0 0.0
      %2332 = vmatprep.subr.mxu0 0.0
      %2333 = vmatpush2.msra.mxu0 0.0
      %2334 = vmatprep.subr.mxu0 0.0
      %2335 = vmatpush2.msra.mxu0 0.0
      %2336 = vmatprep.subr.mxu0 0.0
      %2337 = vmatpush2.msra.mxu0 0.0
      %2338 = vmatprep.subr.mxu0 0.0
      %2339 = vmatpush2.msra.mxu0 0.0
      %2340 = vmatprep.subr.mxu0 0.0
      %2341 = vmatpush2.msra.mxu0 0.0
      %2342 = vmatprep.subr.mxu0 0.0
      %2343 = vmatpush2.msra.mxu0 0.0
      %2344 = vmatprep.subr.mxu0 0.0
      %2345 = vmatpush2.msra.mxu0 0.0
      %2346 = vmatprep.subr.mxu0 0.0
      %2347 = vmatpush2.msra.mxu0 0.0
      %2348 = vmatprep.subr.mxu0 0.0
      %2349 = vmatpush2.msra.mxu0 0.0
      %2350 = vmatprep.subr.mxu0 0.0
      %2351 = vmatpush2.msra.mxu0 0.0
      %2352 = vmatprep.subr.mxu0 0.0
      %2353 = vmatpush2.msra.mxu0 0.0
      %2354 = vmatprep.subr.mxu0 0.0
      %2355 = vmatpush2.msra.mxu0 0.0
      %2356 = vmatprep.mubr.f32.mxu0 0.0
      %2357 = vmatmul.mubr.f32.gmra.mxu0 %v2275
      %v2358 = vpop.f32.mrf.mxu0
      %v2359 = vadd.f32 0.0, %v2358
      %v2360 = vpop.f32.mrf.mxu0
      %2361 = vdwg.mxu0
      %v2362 = vadd.f32 %v2271, %v2359
      %v2363 = vld [vmem:[#allocation2] sm:$0x1]
      %vm2364 = vcmp.lt.f32.partialorder %v1978, %v2363
      %v2365 = vsel %vm2364, %v1978, %v2363
      %2366 = vst [vmem:[#allocation2] sm:$0x1] %v2365
      %v2367 = vld [vmem:[%s261] sm:$0x1f]
      %v2368 = vsel %vm2364, 1, 0
      %v2369 = vlaneseq
      %v2370 = vshrl.u32 %v2369, 7
      %v2371 = vsub.s32 0, %v2370
      %v2372 = vrot.slane %v2368, %v2371
      %vm2373 = vcmp.eq.s32.totalorder %v2372, 1
      %v2374 = vsel %vm2373, %v2362, %v2367
      %2375 = vst [vmem:[%s261] sm:$0x1f] %v2374
      // Predicated region
      $region37: #{tpu_custom_call.1} parent=31 // pred_check
        %p2376 = pneg %p262
      $region38: #{tpu_custom_call.1} parent=31 // pred_check_branch
        %2378 = sbr.rel (%p2376) target = $region40
      $region39: #{tpu_custom_call.1} parent=31 // pred_region
        %v2379 = vld [vmem:[#allocation2] sm:$0x1]
        %vm2380 = vcmp.lt.f32.partialorder %v2379, inf
        %v2381 = vsel %vm2380, 1, 0
        %v2382 = vcvt.s32.f32 %v2381
        %2383 = vst [vmem:[%s261 + $0x4] sm:$0x1] %v2382
      $region40: #{tpu_custom_call.1} parent=31 // pred_fallthru
        _
      %p2384 = scmp.lt.s32.totalorder %s19, 1
      %s2385 = scalar_select %p2384, %s19, 1
      %p2386 = scmp.lt.s32.totalorder %s20, 1
      %s2387 = scalar_select %p2386, %s20, 1
      %s2388 = smul.addr %s2385, 2
      %s2389 = sadd.s32 %s2387, %s2388
      %s2390 = smul.addr %s2389, 8
      %s2391 = scalar_lea.vmem %s3, %s2390
      // Predicated region
      $region41: #{tpu_custom_call.1} parent=31 // pred_check
        %p2392 = pneg %p135
      $region42: #{tpu_custom_call.1} parent=31 // pred_check_branch
        %2394 = sbr.rel (%p2392) target = $region44
      $region43: #{tpu_custom_call.1} parent=31 // pred_region
        _
      $region44: #{tpu_custom_call.1} parent=31 // pred_fallthru
        _
    $region32: #{tpu_custom_call.1} parent=5 // pred_fallthru
      _
    %p2395 = scmp.le.s32.totalorder 2, %s9
    // Predicated region
    $region45: #{tpu_custom_call.1} parent=5 // pred_check
      %p2396 = pneg %p2395
    $region46: #{tpu_custom_call.1} parent=5 // pred_check_branch
      %2398 = sbr.rel (%p2396) target = $region48
    $region47: #{tpu_custom_call.1} parent=5 // pred_region
      %s2399 = ssub.s32 %s9, 2
      // Predicated region
      $region49: #{tpu_custom_call.1} parent=47 // pred_check
        %p2400 = pneg %p141
      $region50: #{tpu_custom_call.1} parent=47 // pred_check_branch
        %2402 = sbr.rel (%p2400) target = $region52
      $region51: #{tpu_custom_call.1} parent=47 // pred_region
        %p2403 = scmp.lt.s32.totalorder %s22, 1
        %s2404 = scalar_select %p2403, %s22, 1
        %p2405 = scmp.lt.s32.totalorder %s23, 1
        %s2406 = scalar_select %p2405, %s23, 1
        %s2407 = smul.addr %s2404, 2
        %s2408 = sadd.s32 %s2406, %s2407
        %s2409 = smul.addr %s2408, 8
        %s2410 = scalar_lea.vmem %s3, %s2409
      $region52: #{tpu_custom_call.1} parent=47 // pred_fallthru
        _
    $region48: #{tpu_custom_call.1} parent=5 // pred_fallthru
      _
  $region6: #{tpu_custom_call.1} parent=0 // loop_footer
    %s13 = sadd.s32 1, %s9
  $region7: #{tpu_custom_call.1} parent=0 // loop_footer_branch
    %8 = sbr.rel target = $region3
  $region8: #{tpu_custom_call.1} parent=0 // loop_exit
    _

</llo_original>
